<compile_context>
chip_gen: v7x
topology: tpu7x:2x2x1
jax: 0.10.0
libtpu: 0.0.40
codegen_flags: <defaults>
</compile_context>

<pallas_src>
import functools
import random

import jax
import jax.numpy as jnp
from jax.experimental import pallas as pl
from jax.experimental.pallas import tpu as pltpu


# ----------------------------- config (small) -----------------------------
VOCAB = 32          # config.vocab_size == config.output_size
EMB = 16            # config.embedding_size
HID = 32            # config.hidden_size
OUT = VOCAB         # config.output_size
LATENT = 8          # CVAE latent size
B = 2               # batch_size (articles)
BP = 8              # in-kernel batch padded to a full sublane group
NUM = 3             # sentences per article
T_SRC = 8           # max sentence length
T_TGT = 6           # target (summary) length

LANE = 128          # TPU lane width
NEG = -1e30         # logit value for padded lanes (softmax prob 0, never argmax)


def _vmem():
    return pl.BlockSpec(memory_space=pltpu.MemorySpace.VMEM)


# ----------------------------- fused Pallas kernel -----------------------------

def kgcvae_kernel(enc_ref, w1_ref, w2_ref, w3_ref, w4_ref, b_enc_ref,
                  w_gru_ref, b_gru_ref, w_out_ref, b_out_ref, tgt_ref,
                  out_ref, mlp_ref, *, tf_steps, n_real):
    f32 = jnp.float32
    dot = lambda a, b: jnp.dot(a, b, preferred_element_type=f32)
    T, BPk, _ = out_ref.shape

    # ---------------- CVAE encoder head: 4 fused matmuls (was 12) ----------------
    u1 = enc_ref[0]                                   # [BP,128]: a in 0:15, xm in 16:31
    eps = enc_ref[1]                                  # [BP,128]: eps in 0:7, pads 0

    # M1: block-diagonal -> [c | xr] packed in one 64-lane slab
    cx = jnp.tanh(dot(u1[:, :2 * EMB], w1_ref[...]) + b_enc_ref[0:1, :2 * HID])

    # M2: one matmul -> four vreg-aligned 128-lane blocks (all at lane offset 0)
    g2 = dot(cx, w2_ref[...]) + b_enc_ref[1:2, :]     # [BP, 512]
    mu,  logvar   = g2[:, 0 * LANE:1 * LANE], g2[:, 1 * LANE:2 * LANE]
    mu_p, logvar_p = g2[:, 2 * LANE:3 * LANE], g2[:, 3 * LANE:4 * LANE]

    z = mu + jnp.exp(0.5 * logvar) * eps              # pads stay exactly 0
    kl = 0.5 * (logvar_p - logvar
                + (jnp.exp(logvar) + (mu - mu_p) ** 2) * jnp.exp(-logvar_p) - 1.0)
    row = jax.lax.broadcasted_iota(jnp.int32, (BPk, LANE), 0)
    kld = jnp.sum(jnp.where(row < n_real, kl, 0.0))   # exclude padded batch rows

    # M3: hidden = c@W_hid_c + z@W_hid_z via packed [c | z] operand
    u3 = jnp.concatenate([cx[:, :HID], z[:, :HID]], axis=-1)       # [BP, 64]
    hidden = dot(u3, w3_ref[...]) + b_enc_ref[2:3, :2 * HID]       # [BP, 64]

    # M4: one matmul -> [MLP logits (block 0, pad lanes -inf) | init hidden (block 1)]
    r4 = dot(hidden, w4_ref[...]) + b_enc_ref[3:4, :2 * LANE]      # [BP, 256]
    lm = r4[:, :LANE]
    h = r4[:, LANE:2 * LANE]                                        # pad lanes are 0

    # MLP softmax head; KLD scalar stashed in the last (padded) batch row
    em = jnp.exp(lm - jnp.max(lm, axis=-1, keepdims=True))
    probs = em * pl.reciprocal(jnp.sum(em, axis=-1, keepdims=True), approx=True)
    mlp_ref[...] = jnp.where(row == BPk - 1, kld, probs)            # lane-dense store

    # ---------------- GRU decode loop (fully unrolled, static TF pattern) ----------------
    lane = jax.lax.broadcasted_iota(jnp.int32, (BPk, LANE), 1)
    wg = w_gru_ref[...]                                             # hoisted loads /
    bg = jnp.broadcast_to(b_gru_ref[...], (BPk, 4 * LANE))          # bias broadcasts
    wo = w_out_ref[...]
    bo = jnp.broadcast_to(b_out_ref[...], (BPk, LANE))

    x_in = (lane == 1 + HID).astype(f32)              # GO token (id 1), shifted by HID lanes
    for step in range(T):
        # packed 128-lane operand: h in lanes 0:31, token one-hot in lanes 32:63
        p = h + x_in                                  # disjoint lanes -> plain VPU add
        g = dot(p, wg) + bg                           # [BP, 512] = [r | z | n_i | n_h]
        r  = jax.nn.sigmoid(g[:, 0 * LANE:1 * LANE])  # vreg-aligned gate blocks
        zg = jax.nn.sigmoid(g[:, 1 * LANE:2 * LANE])
        n  = jnp.tanh(g[:, 2 * LANE:3 * LANE] + r * g[:, 3 * LANE:4 * LANE])
        h  = (1.0 - zg) * n + zg * h                  # padded lanes provably stay 0

        logits = dot(h[:, :HID], wo) + bo             # K-trimmed [8,32]@[32,128], pads=-inf
        mx = jnp.max(logits, axis=-1, keepdims=True)
        e = jnp.exp(logits - mx)
        out_ref[step] = e * pl.reciprocal(jnp.sum(e, axis=-1, keepdims=True),
                                          approx=True)              # lane-dense store

        if step + 1 < T:
            if tf_steps[step]:
                # teacher-forced: next input is independent of this step's logits,
                # so the recurrence skips the argmax / greedy path entirely.
                x_in = tgt_ref[step]
            else:
                # greedy next token from logits (argmax invariant under softmax)
                first = jnp.min(jnp.where(logits >= mx, lane, LANE),
                                axis=-1, keepdims=True)
                x_in = (lane == first + HID).astype(f32)


def run_kgcvae(enc_in, tgt_sh, tf_steps, n_real, pp):
    kern = functools.partial(kgcvae_kernel,
                             tf_steps=tuple(int(t) for t in tf_steps),
                             n_real=int(n_real))
    return pl.pallas_call(
        kern,
        out_shape=(jax.ShapeDtypeStruct((T_TGT, BP, LANE), jnp.float32),
                   jax.ShapeDtypeStruct((BP, LANE), jnp.float32)),
        in_specs=[_vmem()] * 11,
        out_specs=(_vmem(), _vmem()),
    )(enc_in, pp['w1'], pp['w2'], pp['w3'], pp['w4'], pp['b_enc'],
      pp['w_gru'], pp['b_gru'], pp['w_out'], pp['b_out'], tgt_sh)


# ----------------------------- glue (plain JAX) -----------------------------

def masked_mean_emb(tokens, lens, emb_table):
    emb = emb_table[tokens]                                          # [N, T, E]
    t = tokens.shape[1]
    mask = (jnp.arange(t)[None, :] < lens[:, None]).astype(jnp.float32)
    s = jnp.sum(emb * mask[:, :, None], axis=1)
    return s / jnp.maximum(lens[:, None].astype(jnp.float32), 1.0)


def kgcvae_forward(packed, source, source_lens, target, target_lens,
                   batch_size, descendingOrders, input_article_lens,
                   eps, tf_steps):
    # ---- sentence/article pooling (cheap gather/mean glue) ----
    s_sorted = masked_mean_emb(source, source_lens, packed['emb'])   # [num*B, E]
    s_orig = s_sorted[descendingOrders]                              # restore order
    s_art = s_orig.reshape(batch_size, NUM, EMB)
    amask = (jnp.arange(NUM)[None, :] < input_article_lens[:, None]).astype(jnp.float32)
    a_mean = (jnp.sum(s_art * amask[:, :, None], axis=1)
              / jnp.maximum(input_article_lens[:, None].astype(jnp.float32), 1.0))
    x_mean = masked_mean_emb(target, target_lens, packed['emb'])     # [B, E]

    # pack [a|xm] into lanes 0:31 of one row and eps into lanes 0:7 of another;
    # pad the batch to 8 sublanes (padded rows are masked / sliced away).
    u1 = jnp.concatenate([a_mean, x_mean], axis=-1)                  # [B, 32]

    def pad2(x):
        return jnp.pad(x, ((0, BP - batch_size), (0, LANE - x.shape[1])))

    enc_in = jnp.stack([pad2(u1), pad2(eps)])                        # [2, BP, 128]

    # teacher one-hots, pre-shifted by HID lanes to match the packed GRU operand
    tgt_t = jnp.pad(jnp.transpose(target.astype(jnp.int32)),
                    ((0, 0), (0, BP - batch_size)))                  # [T, BP]
    tgt_sh = jax.nn.one_hot(tgt_t + HID, LANE, dtype=jnp.float32)    # [T, BP, 128]

    out_pad, mlp_pad = run_kgcvae(enc_in, tgt_sh, tf_steps, batch_size, packed)

    outputs = out_pad[:, :batch_size, :OUT]                          # [T, B, O]
    kld = mlp_pad[BP - 1, 0]                                         # stashed scalar
    mlp_probs = mlp_pad[:batch_size, :OUT]                           # [B, O]
    target_len = target.shape[1]
    mlp_outputs = jnp.broadcast_to(mlp_probs[None, :, :],
                                   (target_len, batch_size, OUT))    # lazy broadcast
    return outputs, kld, mlp_outputs


# ----------------------------- params + packing -----------------------------

def init_params(key):
    ks = jax.random.split(key, 14)
    w = lambda k, shape: 0.1 * jax.random.normal(k, shape, jnp.float32)
    return dict(
        emb=w(ks[0], (VOCAB, EMB)),
        W_ctx=w(ks[1], (EMB, HID)),        b_ctx=jnp.zeros((1, HID), jnp.float32),
        W_resp=w(ks[2], (EMB, HID)),       b_resp=jnp.zeros((1, HID), jnp.float32),
        W_recog_c=w(ks[3], (HID, 2 * LATENT)),
        W_recog_x=w(ks[4], (HID, 2 * LATENT)),
        b_recog=jnp.zeros((1, 2 * LATENT), jnp.float32),
        W_prior=w(ks[5], (HID, 2 * LATENT)), b_prior=jnp.zeros((1, 2 * LATENT), jnp.float32),
        W_hid_c=w(ks[6], (HID, 2 * HID)),
        W_hid_z=w(ks[7], (LATENT, 2 * HID)),
        b_hid=jnp.zeros((1, 2 * HID), jnp.float32),
        W_mlp=w(ks[8], (2 * HID, OUT)),    b_mlp=jnp.zeros((1, OUT), jnp.float32),
        W_inith=w(ks[9], (2 * HID, HID)),  b_inith=jnp.zeros((1, HID), jnp.float32),
        W_ih=w(ks[10], (EMB, 3 * HID)),    b_ih=jnp.zeros((1, 3 * HID), jnp.float32),
        W_hh=w(ks[11], (HID, 3 * HID)),    b_hh=jnp.zeros((1, 3 * HID), jnp.float32),
        W_out=w(ks[12], (HID, OUT)),       b_out=jnp.zeros((1, OUT), jnp.float32),
    )


def pack_params(p):
    """Pack logical params into a few K-trimmed, lane-aligned VMEM buffers."""
    f32 = jnp.float32
    H, L, E, O, V = HID, LATENT, EMB, OUT, VOCAB

    # M1: [a|xm] (K=2E) -> [c|xr] (N=2H), block-diagonal.
    w1 = jnp.zeros((2 * E, 2 * H), f32)
    w1 = w1.at[:E, :H].set(p['W_ctx'])
    w1 = w1.at[E:, H:].set(p['W_resp'])

    # M2: [c|xr] (K=2H) -> four 128-lane blocks [mu | logvar | mu_p | logvar_p].
    w2 = jnp.zeros((2 * H, 4 * LANE), f32)
    w2 = w2.at[:H, 0 * LANE:0 * LANE + L].set(p['W_recog_c'][:, :L])
    w2 = w2.at[H:, 0 * LANE:0 * LANE + L].set(p['W_recog_x'][:, :L])
    w2 = w2.at[:H, 1 * LANE:1 * LANE + L].set(p['W_recog_c'][:, L:])
    w2 = w2.at[H:, 1 * LANE:1 * LANE + L].set(p['W_recog_x'][:, L:])
    w2 = w2.at[:H, 2 * LANE:2 * LANE + L].set(p['W_prior'][:, :L])
    w2 = w2.at[:H, 3 * LANE:3 * LANE + L].set(p['W_prior'][:, L:])

    # M3: [c|z] (K=2H, z occupies rows H:H+L) -> hidden (N=2H).
    w3 = jnp.zeros((2 * H, 2 * H), f32)
    w3 = w3.at[:H, :].set(p['W_hid_c'])
    w3 = w3.at[H:H + L, :].set(p['W_hid_z'])

    # M4: hidden (K=2H) -> [MLP logits (block 0) | init hidden (block 1)].
    w4 = jnp.zeros((2 * H, 2 * LANE), f32)
    w4 = w4.at[:, 0 * LANE:0 * LANE + O].set(p['W_mlp'])
    w4 = w4.at[:, 1 * LANE:1 * LANE + H].set(p['W_inith'])

    b_enc = jnp.zeros((4, 4 * LANE), f32)
    b_enc = b_enc.at[0, :H].set(p['b_ctx'][0])
    b_enc = b_enc.at[0, H:2 * H].set(p['b_resp'][0])
    b_enc = b_enc.at[1, 0 * LANE:0 * LANE + L].set(p['b_recog'][0, :L])
    b_enc = b_enc.at[1, 1 * LANE:1 * LANE + L].set(p['b_recog'][0, L:])
    b_enc = b_enc.at[1, 2 * LANE:2 * LANE + L].set(p['b_prior'][0, :L])
    b_enc = b_enc.at[1, 3 * LANE:3 * LANE + L].set(p['b_prior'][0, L:])
    b_enc = b_enc.at[2, :2 * H].set(p['b_hid'][0])
    b_enc = b_enc.at[3, :O].set(p['b_mlp'][0])
    b_enc = b_enc.at[3, O:LANE].set(NEG)               # padded MLP logits -> -inf
    b_enc = b_enc.at[3, LANE:LANE + H].set(p['b_inith'][0])

    # Fused GRU weight for the packed 128-lane input [h (lanes 0:H) | onehot (lanes H:H+V)];
    # gate columns lane-aligned as 128-wide blocks [r | z | n_input | n_hidden].
    emb_Wih = p['emb'] @ p['W_ih']                     # fold embedding lookup: [V, 3H]
    Whh = p['W_hh']
    w_gru = jnp.zeros((LANE, 4 * LANE), f32)
    w_gru = w_gru.at[:H,      0 * LANE:0 * LANE + H].set(Whh[:, 0:H])
    w_gru = w_gru.at[:H,      1 * LANE:1 * LANE + H].set(Whh[:, H:2 * H])
    w_gru = w_gru.at[:H,      3 * LANE:3 * LANE + H].set(Whh[:, 2 * H:3 * H])
    w_gru = w_gru.at[H:H + V, 0 * LANE:0 * LANE + H].set(emb_Wih[:, 0:H])
    w_gru = w_gru.at[H:H + V, 1 * LANE:1 * LANE + H].set(emb_Wih[:, H:2 * H])
    w_gru = w_gru.at[H:H + V, 2 * LANE:2 * LANE + H].set(emb_Wih[:, 2 * H:3 * H])

    b_ih, b_hh = p['b_ih'][0], p['b_hh'][0]
    b_gru = jnp.zeros((1, 4 * LANE), f32)
    b_gru = b_gru.at[0, 0 * LANE:0 * LANE + H].set(b_ih[0:H] + b_hh[0:H])
    b_gru = b_gru.at[0, 1 * LANE:1 * LANE + H].set(b_ih[H:2 * H] + b_hh[H:2 * H])
    b_gru = b_gru.at[0, 2 * LANE:2 * LANE + H].set(b_ih[2 * H:3 * H])
    b_gru = b_gru.at[0, 3 * LANE:3 * LANE + H].set(b_hh[2 * H:3 * H])

    # K-trimmed output projection (true K = HID = 32); padded logits -> -inf.
    w_out = jnp.zeros((H, LANE), f32).at[:, :O].set(p['W_out'])
    b_out = jnp.full((1, LANE), NEG, f32).at[:, :O].set(p['b_out'])

    return dict(emb=p['emb'], w1=w1, w2=w2, w3=w3, w4=w4, b_enc=b_enc,
                w_gru=w_gru, b_gru=b_gru, w_out=w_out, b_out=b_out)


# ----------------------------- main -----------------------------

if __name__ == "__main__":
    key = jax.random.PRNGKey(0)
    kp, k_src, k_len, k_tgt, k_eps = jax.random.split(key, 5)
    params = init_params(kp)
    packed = pack_params(params)

    # sentence collection: [num*B, T_SRC], length-sorted descending + restore index
    src_orig = jax.random.randint(k_src, (NUM * B, T_SRC), 3, VOCAB, dtype=jnp.int32)
    lens_orig = jax.random.randint(k_len, (NUM * B,), 2, T_SRC + 1, dtype=jnp.int32)
    order = jnp.argsort(-lens_orig)
    source = src_orig[order]
    source_lens = lens_orig[order]
    descendingOrders = jnp.argsort(order).astype(jnp.int32)

    target = jax.random.randint(k_tgt, (B, T_TGT), 3, VOCAB, dtype=jnp.int32)
    target_lens = jnp.array([T_TGT, T_TGT - 1], dtype=jnp.int32)
    input_article_lens = jnp.array([NUM, NUM - 1], dtype=jnp.int32)

    # per-step teacher-forcing decisions (PyTorch draws them with Python's
    # random.random() per forward call, i.e. they are static per trace)
    random.seed(0)
    teacher_forcing_ratio = 0.5
    tf_steps = tuple(1 if random.random() < teacher_forcing_ratio else 0
                     for _ in range(T_TGT))

    # reparameterization noise for the CVAE latent
    eps = jax.random.normal(k_eps, (B, LATENT), jnp.float32)

    fwd = jax.jit(kgcvae_forward, static_argnums=(5, 9))
    outputs, KLD, mlp_outputs = fwd(
        packed, source, source_lens, target, target_lens,
        B, descendingOrders, input_article_lens, eps, tf_steps)

    jax.block_until_ready((outputs, KLD, mlp_outputs))
    assert outputs.shape == (T_TGT, B, OUT)
    assert mlp_outputs.shape == (T_TGT, B, OUT)
    assert KLD.shape == ()
    # decoder / MLP outputs are probability distributions over the real vocab lanes
    # (approx reciprocal -> allow a slightly looser tolerance)
    assert bool(jnp.allclose(jnp.sum(outputs, axis=-1), 1.0, atol=2e-3))
    assert bool(jnp.allclose(jnp.sum(mlp_outputs, axis=-1), 1.0, atol=2e-3))
    assert bool(jnp.isfinite(KLD))
    print("KERNEL_OK")
</pallas_src>

<mosaic_0001>
module attributes {stable_mosaic.version = 11 : i64} {
  func.func @kgcvae_kernel(%arg0: memref<2x8x128xf32, #tpu.memory_space<vmem>>, %arg1: memref<32x64xf32, #tpu.memory_space<vmem>>, %arg2: memref<64x512xf32, #tpu.memory_space<vmem>>, %arg3: memref<64x64xf32, #tpu.memory_space<vmem>>, %arg4: memref<64x256xf32, #tpu.memory_space<vmem>>, %arg5: memref<4x512xf32, #tpu.memory_space<vmem>>, %arg6: memref<128x512xf32, #tpu.memory_space<vmem>>, %arg7: memref<1x512xf32, #tpu.memory_space<vmem>>, %arg8: memref<32x128xf32, #tpu.memory_space<vmem>>, %arg9: memref<1x128xf32, #tpu.memory_space<vmem>>, %arg10: memref<6x8x128xf32, #tpu.memory_space<vmem>>, %arg11: memref<6x8x128xf32, #tpu.memory_space<vmem>>, %arg12: memref<8x128xf32, #tpu.memory_space<vmem>>) attributes {dimension_semantics = [], scalar_prefetch = 0 : i64, scratch_operands = 0 : i64, tpu.core_type = #tpu.core_type<tc>} {
    %c0 = arith.constant 0 : index
    %c0_0 = arith.constant 0 : index
    %c0_1 = arith.constant 0 : index
    %0 = vector.load %arg0[%c0, %c0_0, %c0_1] : memref<2x8x128xf32, #tpu.memory_space<vmem>>, vector<1x8x128xf32>
    %1 = vector.shape_cast %0 : vector<1x8x128xf32> to vector<8x128xf32>
    %c1 = arith.constant 1 : index
    %c0_2 = arith.constant 0 : index
    %c0_3 = arith.constant 0 : index
    %2 = vector.load %arg0[%c1, %c0_2, %c0_3] : memref<2x8x128xf32, #tpu.memory_space<vmem>>, vector<1x8x128xf32>
    %3 = vector.shape_cast %2 : vector<1x8x128xf32> to vector<8x128xf32>
    %4 = vector.extract_strided_slice %1 {offsets = [0, 0], sizes = [8, 32], strides = [1, 1]} : vector<8x128xf32> to vector<8x32xf32>
    %c0_4 = arith.constant 0 : index
    %c0_5 = arith.constant 0 : index
    %5 = vector.load %arg1[%c0_4, %c0_5] : memref<32x64xf32, #tpu.memory_space<vmem>>, vector<32x64xf32>
    %cst = arith.constant dense<0.000000e+00> : vector<8x64xf32>
    %6 = tpu.matmul %4, %5, %cst {dimension_numbers = #tpu.dot_dimension_numbers<[1], [0], [0], [1], [0, 0, 1, 1], [], []>} : vector<8x32xf32>, vector<32x64xf32>, vector<8x64xf32> -> vector<8x64xf32>
    %c0_6 = arith.constant 0 : index
    %c0_7 = arith.constant 0 : index
    %7 = vector.load %arg5[%c0_6, %c0_7] : memref<4x512xf32, #tpu.memory_space<vmem>>, vector<1x64xf32>
    %8 = vector.broadcast %7 : vector<1x64xf32> to vector<8x64xf32>
    %9 = arith.addf %6, %8 : vector<8x64xf32>
    %10 = math.tanh %9 : vector<8x64xf32>
    %c0_8 = arith.constant 0 : index
    %c0_9 = arith.constant 0 : index
    %11 = vector.load %arg2[%c0_8, %c0_9] : memref<64x512xf32, #tpu.memory_space<vmem>>, vector<64x512xf32>
    %cst_10 = arith.constant dense<0.000000e+00> : vector<8x512xf32>
    %12 = tpu.matmul %10, %11, %cst_10 {dimension_numbers = #tpu.dot_dimension_numbers<[1], [0], [0], [1], [0, 0, 1, 1], [], []>} : vector<8x64xf32>, vector<64x512xf32>, vector<8x512xf32> -> vector<8x512xf32>
    %c1_11 = arith.constant 1 : index
    %c0_12 = arith.constant 0 : index
    %13 = vector.load %arg5[%c1_11, %c0_12] : memref<4x512xf32, #tpu.memory_space<vmem>>, vector<1x512xf32>
    %14 = vector.broadcast %13 : vector<1x512xf32> to vector<8x512xf32>
    %15 = arith.addf %12, %14 : vector<8x512xf32>
    %16 = vector.extract_strided_slice %15 {offsets = [0, 0], sizes = [8, 128], strides = [1, 1]} : vector<8x512xf32> to vector<8x128xf32>
    %17 = vector.extract_strided_slice %15 {offsets = [0, 128], sizes = [8, 128], strides = [1, 1]} : vector<8x512xf32> to vector<8x128xf32>
    %18 = vector.extract_strided_slice %15 {offsets = [0, 256], sizes = [8, 128], strides = [1, 1]} : vector<8x512xf32> to vector<8x128xf32>
    %19 = vector.extract_strided_slice %15 {offsets = [0, 384], sizes = [8, 128], strides = [1, 1]} : vector<8x512xf32> to vector<8x128xf32>
    %cst_13 = arith.constant 5.000000e-01 : f32
    %20 = vector.broadcast %cst_13 : f32 to vector<8x128xf32>
    %21 = arith.mulf %20, %17 : vector<8x128xf32>
    %22 = math.exp %21 : vector<8x128xf32>
    %23 = arith.mulf %22, %3 : vector<8x128xf32>
    %24 = arith.addf %16, %23 : vector<8x128xf32>
    %25 = arith.subf %19, %17 : vector<8x128xf32>
    %26 = math.exp %17 : vector<8x128xf32>
    %27 = arith.subf %16, %18 : vector<8x128xf32>
    %28 = arith.mulf %27, %27 : vector<8x128xf32>
    %29 = arith.addf %26, %28 : vector<8x128xf32>
    %cst_14 = arith.constant 0.000000e+00 : f32
    %30 = vector.broadcast %cst_14 : f32 to vector<8x128xf32>
    %31 = arith.subf %30, %19 : vector<8x128xf32>
    %32 = math.exp %31 : vector<8x128xf32>
    %33 = arith.mulf %29, %32 : vector<8x128xf32>
    %34 = arith.addf %25, %33 : vector<8x128xf32>
    %cst_15 = arith.constant 1.000000e+00 : f32
    %35 = vector.broadcast %cst_15 : f32 to vector<8x128xf32>
    %36 = arith.subf %34, %35 : vector<8x128xf32>
    %cst_16 = arith.constant 5.000000e-01 : f32
    %37 = vector.broadcast %cst_16 : f32 to vector<8x128xf32>
    %38 = arith.mulf %37, %36 : vector<8x128xf32>
    %39 = tpu.iota {dimensions = array<i32: 0>} : vector<8x128xi32>
    %c2_i32 = arith.constant 2 : i32
    %40 = vector.broadcast %c2_i32 : i32 to vector<8x128xi32>
    %41 = arith.cmpi slt, %39, %40 : vector<8x128xi32>
    %cst_17 = arith.constant 0.000000e+00 : f32
    %42 = vector.broadcast %cst_17 : f32 to vector<8x128xf32>
    %43 = arith.select %41, %38, %42 : vector<8x128xi1>, vector<8x128xf32>
    %44 = vector.shape_cast %43 : vector<8x128xf32> to vector<1x8x128xf32>
    %cst_18 = arith.constant dense<0.000000e+00> : vector<1xf32>
    %45 = vector.multi_reduction <add>, %44, %cst_18 [1, 2] : vector<1x8x128xf32> to vector<1xf32>
    %46 = vector.shape_cast %45 : vector<1xf32> to vector<1x1x1xf32>
    %47 = vector.extract %46[0, 0, 0] : f32 from vector<1x1x1xf32>
    %48 = vector.extract_strided_slice %10 {offsets = [0, 0], sizes = [8, 32], strides = [1, 1]} : vector<8x64xf32> to vector<8x32xf32>
    %49 = vector.extract_strided_slice %24 {offsets = [0, 0], sizes = [8, 32], strides = [1, 1]} : vector<8x128xf32> to vector<8x32xf32>
    %50 = tpu.concatenate %48, %49 in 1 : vector<8x32xf32>, vector<8x32xf32> -> vector<8x64xf32>
    %c0_19 = arith.constant 0 : index
    %c0_20 = arith.constant 0 : index
    %51 = vector.load %arg3[%c0_19, %c0_20] : memref<64x64xf32, #tpu.memory_space<vmem>>, vector<64x64xf32>
    %cst_21 = arith.constant dense<0.000000e+00> : vector<8x64xf32>
    %52 = tpu.matmul %50, %51, %cst_21 {dimension_numbers = #tpu.dot_dimension_numbers<[1], [0], [0], [1], [0, 0, 1, 1], [], []>} : vector<8x64xf32>, vector<64x64xf32>, vector<8x64xf32> -> vector<8x64xf32>
    %c2 = arith.constant 2 : index
    %c0_22 = arith.constant 0 : index
    %53 = vector.load %arg5[%c2, %c0_22] : memref<4x512xf32, #tpu.memory_space<vmem>>, vector<1x64xf32>
    %54 = vector.broadcast %53 : vector<1x64xf32> to vector<8x64xf32>
    %55 = arith.addf %52, %54 : vector<8x64xf32>
    %c0_23 = arith.constant 0 : index
    %c0_24 = arith.constant 0 : index
    %56 = vector.load %arg4[%c0_23, %c0_24] : memref<64x256xf32, #tpu.memory_space<vmem>>, vector<64x256xf32>
    %cst_25 = arith.constant dense<0.000000e+00> : vector<8x256xf32>
    %57 = tpu.matmul %55, %56, %cst_25 {dimension_numbers = #tpu.dot_dimension_numbers<[1], [0], [0], [1], [0, 0, 1, 1], [], []>} : vector<8x64xf32>, vector<64x256xf32>, vector<8x256xf32> -> vector<8x256xf32>
    %c3 = arith.constant 3 : index
    %c0_26 = arith.constant 0 : index
    %58 = vector.load %arg5[%c3, %c0_26] : memref<4x512xf32, #tpu.memory_space<vmem>>, vector<1x256xf32>
    %59 = vector.broadcast %58 : vector<1x256xf32> to vector<8x256xf32>
    %60 = arith.addf %57, %59 : vector<8x256xf32>
    %61 = vector.extract_strided_slice %60 {offsets = [0, 0], sizes = [8, 128], strides = [1, 1]} : vector<8x256xf32> to vector<8x128xf32>
    %62 = vector.extract_strided_slice %60 {offsets = [0, 128], sizes = [8, 128], strides = [1, 1]} : vector<8x256xf32> to vector<8x128xf32>
    %cst_27 = arith.constant dense<0xFF800000> : vector<8xf32>
    %63 = vector.multi_reduction <maximumf>, %61, %cst_27 [1] : vector<8x128xf32> to vector<8xf32>
    %64 = vector.shape_cast %63 : vector<8xf32> to vector<8x1xf32>
    %65 = vector.broadcast %64 : vector<8x1xf32> to vector<8x128xf32>
    %66 = arith.subf %61, %65 : vector<8x128xf32>
    %67 = math.exp %66 : vector<8x128xf32>
    %cst_28 = arith.constant dense<0.000000e+00> : vector<8xf32>
    %68 = vector.multi_reduction <add>, %67, %cst_28 [1] : vector<8x128xf32> to vector<8xf32>
    %69 = vector.shape_cast %68 : vector<8xf32> to vector<8x1xf32>
    %70 = tpu.reciprocal %69 {approx = true} : vector<8x1xf32> -> vector<8x1xf32>
    %71 = vector.broadcast %70 : vector<8x1xf32> to vector<8x128xf32>
    %72 = arith.mulf %67, %71 : vector<8x128xf32>
    %c7_i32 = arith.constant 7 : i32
    %73 = vector.broadcast %c7_i32 : i32 to vector<8x128xi32>
    %74 = arith.cmpi eq, %39, %73 : vector<8x128xi32>
    %75 = vector.broadcast %47 : f32 to vector<8x128xf32>
    %76 = arith.select %74, %75, %72 : vector<8x128xi1>, vector<8x128xf32>
    %c0_29 = arith.constant 0 : index
    %c0_30 = arith.constant 0 : index
    %77 = vector.load %arg12[%c0_29, %c0_30] : memref<8x128xf32, #tpu.memory_space<vmem>>, vector<8x128xf32>
    tpu.vector_store %arg12[%c0_29, %c0_30], %76 {strides = array<i32>} : memref<8x128xf32, #tpu.memory_space<vmem>>, vector<8x128xf32>,
    %78 = tpu.iota {dimensions = array<i32: 1>} : vector<8x128xi32>
    %c0_31 = arith.constant 0 : index
    %c0_32 = arith.constant 0 : index
    %79 = vector.load %arg6[%c0_31, %c0_32] : memref<128x512xf32, #tpu.memory_space<vmem>>, vector<128x512xf32>
    %c0_33 = arith.constant 0 : index
    %c0_34 = arith.constant 0 : index
    %80 = vector.load %arg7[%c0_33, %c0_34] : memref<1x512xf32, #tpu.memory_space<vmem>>, vector<1x512xf32>
    %81 = vector.shape_cast %80 : vector<1x512xf32> to vector<1x512xf32>
    %82 = vector.broadcast %81 : vector<1x512xf32> to vector<8x512xf32>
    %c0_35 = arith.constant 0 : index
    %c0_36 = arith.constant 0 : index
    %83 = vector.load %arg8[%c0_35, %c0_36] : memref<32x128xf32, #tpu.memory_space<vmem>>, vector<32x128xf32>
    %c0_37 = arith.constant 0 : index
    %c0_38 = arith.constant 0 : index
    %84 = vector.load %arg9[%c0_37, %c0_38] : memref<1x128xf32, #tpu.memory_space<vmem>>, vector<1x128xf32>
    %85 = vector.shape_cast %84 : vector<1x128xf32> to vector<1x128xf32>
    %86 = vector.broadcast %85 : vector<1x128xf32> to vector<8x128xf32>
    %c33_i32 = arith.constant 33 : i32
    %87 = vector.broadcast %c33_i32 : i32 to vector<8x128xi32>
    %88 = arith.cmpi eq, %78, %87 : vector<8x128xi32>
    %89 = arith.extui %88 : vector<8x128xi1> to vector<8x128xi32>
    %90 = arith.sitofp %89 : vector<8x128xi32> to vector<8x128xf32>
    %91 = arith.addf %62, %90 : vector<8x128xf32>
    %cst_39 = arith.constant dense<0.000000e+00> : vector<8x512xf32>
    %92 = tpu.matmul %91, %79, %cst_39 {dimension_numbers = #tpu.dot_dimension_numbers<[1], [0], [0], [1], [0, 0, 1, 1], [], []>} : vector<8x128xf32>, vector<128x512xf32>, vector<8x512xf32> -> vector<8x512xf32>
    %93 = arith.addf %92, %82 : vector<8x512xf32>
    %94 = vector.extract_strided_slice %93 {offsets = [0, 0], sizes = [8, 128], strides = [1, 1]} : vector<8x512xf32> to vector<8x128xf32>
    %95 = arith.negf %94 : vector<8x128xf32>
    %96 = math.exp %95 : vector<8x128xf32>
    %cst_40 = arith.constant 1.000000e+00 : f32
    %97 = vector.broadcast %cst_40 : f32 to vector<8x128xf32>
    %98 = arith.addf %97, %96 : vector<8x128xf32>
    %99 = arith.divf %97, %98 : vector<8x128xf32>
    %100 = vector.extract_strided_slice %93 {offsets = [0, 128], sizes = [8, 128], strides = [1, 1]} : vector<8x512xf32> to vector<8x128xf32>
    %101 = arith.negf %100 : vector<8x128xf32>
    %102 = math.exp %101 : vector<8x128xf32>
    %cst_41 = arith.constant 1.000000e+00 : f32
    %103 = vector.broadcast %cst_41 : f32 to vector<8x128xf32>
    %104 = arith.addf %103, %102 : vector<8x128xf32>
    %105 = arith.divf %103, %104 : vector<8x128xf32>
    %106 = vector.extract_strided_slice %93 {offsets = [0, 256], sizes = [8, 128], strides = [1, 1]} : vector<8x512xf32> to vector<8x128xf32>
    %107 = vector.extract_strided_slice %93 {offsets = [0, 384], sizes = [8, 128], strides = [1, 1]} : vector<8x512xf32> to vector<8x128xf32>
    %108 = arith.mulf %99, %107 : vector<8x128xf32>
    %109 = arith.addf %106, %108 : vector<8x128xf32>
    %110 = math.tanh %109 : vector<8x128xf32>
    %cst_42 = arith.constant 1.000000e+00 : f32
    %111 = vector.broadcast %cst_42 : f32 to vector<8x128xf32>
    %112 = arith.subf %111, %105 : vector<8x128xf32>
    %113 = arith.mulf %112, %110 : vector<8x128xf32>
    %114 = arith.mulf %105, %62 : vector<8x128xf32>
    %115 = arith.addf %113, %114 : vector<8x128xf32>
    %116 = vector.extract_strided_slice %115 {offsets = [0, 0], sizes = [8, 32], strides = [1, 1]} : vector<8x128xf32> to vector<8x32xf32>
    %cst_43 = arith.constant dense<0.000000e+00> : vector<8x128xf32>
    %117 = tpu.matmul %116, %83, %cst_43 {dimension_numbers = #tpu.dot_dimension_numbers<[1], [0], [0], [1], [0, 0, 1, 1], [], []>} : vector<8x32xf32>, vector<32x128xf32>, vector<8x128xf32> -> vector<8x128xf32>
    %118 = arith.addf %117, %86 : vector<8x128xf32>
    %cst_44 = arith.constant dense<0xFF800000> : vector<8xf32>
    %119 = vector.multi_reduction <maximumf>, %118, %cst_44 [1] : vector<8x128xf32> to vector<8xf32>
    %120 = vector.shape_cast %119 : vector<8xf32> to vector<8x1xf32>
    %121 = vector.broadcast %120 : vector<8x1xf32> to vector<8x128xf32>
    %122 = arith.subf %118, %121 : vector<8x128xf32>
    %123 = math.exp %122 : vector<8x128xf32>
    %cst_45 = arith.constant dense<0.000000e+00> : vector<8xf32>
    %124 = vector.multi_reduction <add>, %123, %cst_45 [1] : vector<8x128xf32> to vector<8xf32>
    %125 = vector.shape_cast %124 : vector<8xf32> to vector<8x1xf32>
    %126 = tpu.reciprocal %125 {approx = true} : vector<8x1xf32> -> vector<8x1xf32>
    %127 = vector.broadcast %126 : vector<8x1xf32> to vector<8x128xf32>
    %128 = arith.mulf %123, %127 : vector<8x128xf32>
    %c0_46 = arith.constant 0 : index
    %c0_47 = arith.constant 0 : index
    %c0_48 = arith.constant 0 : index
    %129 = vector.load %arg11[%c0_46, %c0_47, %c0_48] : memref<6x8x128xf32, #tpu.memory_space<vmem>>, vector<1x8x128xf32>
    %130 = vector.shape_cast %129 : vector<1x8x128xf32> to vector<8x128xf32>
    %131 = vector.shape_cast %128 : vector<8x128xf32> to vector<1x8x128xf32>
    tpu.vector_store %arg11[%c0_46, %c0_47, %c0_48], %131 {strides = array<i32>} : memref<6x8x128xf32, #tpu.memory_space<vmem>>, vector<1x8x128xf32>,
    %132 = vector.broadcast %120 : vector<8x1xf32> to vector<8x128xf32>
    %133 = arith.cmpf oge, %118, %132 : vector<8x128xf32>
    %c128_i32 = arith.constant 128 : i32
    %134 = vector.broadcast %c128_i32 : i32 to vector<8x128xi32>
    %135 = arith.select %133, %78, %134 : vector<8x128xi1>, vector<8x128xi32>
    %cst_49 = arith.constant dense<2147483647> : vector<8xi32>
    %136 = vector.multi_reduction <minsi>, %135, %cst_49 [1] : vector<8x128xi32> to vector<8xi32>
    %137 = vector.shape_cast %136 : vector<8xi32> to vector<8x1xi32>
    %c32_i32 = arith.constant 32 : i32
    %138 = vector.broadcast %c32_i32 : i32 to vector<8x1xi32>
    %139 = arith.addi %137, %138 : vector<8x1xi32>
    %140 = vector.broadcast %139 : vector<8x1xi32> to vector<8x128xi32>
    %141 = arith.cmpi eq, %78, %140 : vector<8x128xi32>
    %142 = arith.extui %141 : vector<8x128xi1> to vector<8x128xi32>
    %143 = arith.sitofp %142 : vector<8x128xi32> to vector<8x128xf32>
    %144 = arith.addf %115, %143 : vector<8x128xf32>
    %cst_50 = arith.constant dense<0.000000e+00> : vector<8x512xf32>
    %145 = tpu.matmul %144, %79, %cst_50 {dimension_numbers = #tpu.dot_dimension_numbers<[1], [0], [0], [1], [0, 0, 1, 1], [], []>} : vector<8x128xf32>, vector<128x512xf32>, vector<8x512xf32> -> vector<8x512xf32>
    %146 = arith.addf %145, %82 : vector<8x512xf32>
    %147 = vector.extract_strided_slice %146 {offsets = [0, 0], sizes = [8, 128], strides = [1, 1]} : vector<8x512xf32> to vector<8x128xf32>
    %148 = arith.negf %147 : vector<8x128xf32>
    %149 = math.exp %148 : vector<8x128xf32>
    %cst_51 = arith.constant 1.000000e+00 : f32
    %150 = vector.broadcast %cst_51 : f32 to vector<8x128xf32>
    %151 = arith.addf %150, %149 : vector<8x128xf32>
    %152 = arith.divf %150, %151 : vector<8x128xf32>
    %153 = vector.extract_strided_slice %146 {offsets = [0, 128], sizes = [8, 128], strides = [1, 1]} : vector<8x512xf32> to vector<8x128xf32>
    %154 = arith.negf %153 : vector<8x128xf32>
    %155 = math.exp %154 : vector<8x128xf32>
    %cst_52 = arith.constant 1.000000e+00 : f32
    %156 = vector.broadcast %cst_52 : f32 to vector<8x128xf32>
    %157 = arith.addf %156, %155 : vector<8x128xf32>
    %158 = arith.divf %156, %157 : vector<8x128xf32>
    %159 = vector.extract_strided_slice %146 {offsets = [0, 256], sizes = [8, 128], strides = [1, 1]} : vector<8x512xf32> to vector<8x128xf32>
    %160 = vector.extract_strided_slice %146 {offsets = [0, 384], sizes = [8, 128], strides = [1, 1]} : vector<8x512xf32> to vector<8x128xf32>
    %161 = arith.mulf %152, %160 : vector<8x128xf32>
    %162 = arith.addf %159, %161 : vector<8x128xf32>
    %163 = math.tanh %162 : vector<8x128xf32>
    %cst_53 = arith.constant 1.000000e+00 : f32
    %164 = vector.broadcast %cst_53 : f32 to vector<8x128xf32>
    %165 = arith.subf %164, %158 : vector<8x128xf32>
    %166 = arith.mulf %165, %163 : vector<8x128xf32>
    %167 = arith.mulf %158, %115 : vector<8x128xf32>
    %168 = arith.addf %166, %167 : vector<8x128xf32>
    %169 = vector.extract_strided_slice %168 {offsets = [0, 0], sizes = [8, 32], strides = [1, 1]} : vector<8x128xf32> to vector<8x32xf32>
    %cst_54 = arith.constant dense<0.000000e+00> : vector<8x128xf32>
    %170 = tpu.matmul %169, %83, %cst_54 {dimension_numbers = #tpu.dot_dimension_numbers<[1], [0], [0], [1], [0, 0, 1, 1], [], []>} : vector<8x32xf32>, vector<32x128xf32>, vector<8x128xf32> -> vector<8x128xf32>
    %171 = arith.addf %170, %86 : vector<8x128xf32>
    %cst_55 = arith.constant dense<0xFF800000> : vector<8xf32>
    %172 = vector.multi_reduction <maximumf>, %171, %cst_55 [1] : vector<8x128xf32> to vector<8xf32>
    %173 = vector.shape_cast %172 : vector<8xf32> to vector<8x1xf32>
    %174 = vector.broadcast %173 : vector<8x1xf32> to vector<8x128xf32>
    %175 = arith.subf %171, %174 : vector<8x128xf32>
    %176 = math.exp %175 : vector<8x128xf32>
    %cst_56 = arith.constant dense<0.000000e+00> : vector<8xf32>
    %177 = vector.multi_reduction <add>, %176, %cst_56 [1] : vector<8x128xf32> to vector<8xf32>
    %178 = vector.shape_cast %177 : vector<8xf32> to vector<8x1xf32>
    %179 = tpu.reciprocal %178 {approx = true} : vector<8x1xf32> -> vector<8x1xf32>
    %180 = vector.broadcast %179 : vector<8x1xf32> to vector<8x128xf32>
    %181 = arith.mulf %176, %180 : vector<8x128xf32>
    %c1_57 = arith.constant 1 : index
    %c0_58 = arith.constant 0 : index
    %c0_59 = arith.constant 0 : index
    %182 = vector.load %arg11[%c1_57, %c0_58, %c0_59] : memref<6x8x128xf32, #tpu.memory_space<vmem>>, vector<1x8x128xf32>
    %183 = vector.shape_cast %182 : vector<1x8x128xf32> to vector<8x128xf32>
    %184 = vector.shape_cast %181 : vector<8x128xf32> to vector<1x8x128xf32>
    tpu.vector_store %arg11[%c1_57, %c0_58, %c0_59], %184 {strides = array<i32>} : memref<6x8x128xf32, #tpu.memory_space<vmem>>, vector<1x8x128xf32>,
    %185 = vector.broadcast %173 : vector<8x1xf32> to vector<8x128xf32>
    %186 = arith.cmpf oge, %171, %185 : vector<8x128xf32>
    %c128_i32_60 = arith.constant 128 : i32
    %187 = vector.broadcast %c128_i32_60 : i32 to vector<8x128xi32>
    %188 = arith.select %186, %78, %187 : vector<8x128xi1>, vector<8x128xi32>
    %cst_61 = arith.constant dense<2147483647> : vector<8xi32>
    %189 = vector.multi_reduction <minsi>, %188, %cst_61 [1] : vector<8x128xi32> to vector<8xi32>
    %190 = vector.shape_cast %189 : vector<8xi32> to vector<8x1xi32>
    %c32_i32_62 = arith.constant 32 : i32
    %191 = vector.broadcast %c32_i32_62 : i32 to vector<8x1xi32>
    %192 = arith.addi %190, %191 : vector<8x1xi32>
    %193 = vector.broadcast %192 : vector<8x1xi32> to vector<8x128xi32>
    %194 = arith.cmpi eq, %78, %193 : vector<8x128xi32>
    %195 = arith.extui %194 : vector<8x128xi1> to vector<8x128xi32>
    %196 = arith.sitofp %195 : vector<8x128xi32> to vector<8x128xf32>
    %197 = arith.addf %168, %196 : vector<8x128xf32>
    %cst_63 = arith.constant dense<0.000000e+00> : vector<8x512xf32>
    %198 = tpu.matmul %197, %79, %cst_63 {dimension_numbers = #tpu.dot_dimension_numbers<[1], [0], [0], [1], [0, 0, 1, 1], [], []>} : vector<8x128xf32>, vector<128x512xf32>, vector<8x512xf32> -> vector<8x512xf32>
    %199 = arith.addf %198, %82 : vector<8x512xf32>
    %200 = vector.extract_strided_slice %199 {offsets = [0, 0], sizes = [8, 128], strides = [1, 1]} : vector<8x512xf32> to vector<8x128xf32>
    %201 = arith.negf %200 : vector<8x128xf32>
    %202 = math.exp %201 : vector<8x128xf32>
    %cst_64 = arith.constant 1.000000e+00 : f32
    %203 = vector.broadcast %cst_64 : f32 to vector<8x128xf32>
    %204 = arith.addf %203, %202 : vector<8x128xf32>
    %205 = arith.divf %203, %204 : vector<8x128xf32>
    %206 = vector.extract_strided_slice %199 {offsets = [0, 128], sizes = [8, 128], strides = [1, 1]} : vector<8x512xf32> to vector<8x128xf32>
    %207 = arith.negf %206 : vector<8x128xf32>
    %208 = math.exp %207 : vector<8x128xf32>
    %cst_65 = arith.constant 1.000000e+00 : f32
    %209 = vector.broadcast %cst_65 : f32 to vector<8x128xf32>
    %210 = arith.addf %209, %208 : vector<8x128xf32>
    %211 = arith.divf %209, %210 : vector<8x128xf32>
    %212 = vector.extract_strided_slice %199 {offsets = [0, 256], sizes = [8, 128], strides = [1, 1]} : vector<8x512xf32> to vector<8x128xf32>
    %213 = vector.extract_strided_slice %199 {offsets = [0, 384], sizes = [8, 128], strides = [1, 1]} : vector<8x512xf32> to vector<8x128xf32>
    %214 = arith.mulf %205, %213 : vector<8x128xf32>
    %215 = arith.addf %212, %214 : vector<8x128xf32>
    %216 = math.tanh %215 : vector<8x128xf32>
    %cst_66 = arith.constant 1.000000e+00 : f32
    %217 = vector.broadcast %cst_66 : f32 to vector<8x128xf32>
    %218 = arith.subf %217, %211 : vector<8x128xf32>
    %219 = arith.mulf %218, %216 : vector<8x128xf32>
    %220 = arith.mulf %211, %168 : vector<8x128xf32>
    %221 = arith.addf %219, %220 : vector<8x128xf32>
    %222 = vector.extract_strided_slice %221 {offsets = [0, 0], sizes = [8, 32], strides = [1, 1]} : vector<8x128xf32> to vector<8x32xf32>
    %cst_67 = arith.constant dense<0.000000e+00> : vector<8x128xf32>
    %223 = tpu.matmul %222, %83, %cst_67 {dimension_numbers = #tpu.dot_dimension_numbers<[1], [0], [0], [1], [0, 0, 1, 1], [], []>} : vector<8x32xf32>, vector<32x128xf32>, vector<8x128xf32> -> vector<8x128xf32>
    %224 = arith.addf %223, %86 : vector<8x128xf32>
    %cst_68 = arith.constant dense<0xFF800000> : vector<8xf32>
    %225 = vector.multi_reduction <maximumf>, %224, %cst_68 [1] : vector<8x128xf32> to vector<8xf32>
    %226 = vector.shape_cast %225 : vector<8xf32> to vector<8x1xf32>
    %227 = vector.broadcast %226 : vector<8x1xf32> to vector<8x128xf32>
    %228 = arith.subf %224, %227 : vector<8x128xf32>
    %229 = math.exp %228 : vector<8x128xf32>
    %cst_69 = arith.constant dense<0.000000e+00> : vector<8xf32>
    %230 = vector.multi_reduction <add>, %229, %cst_69 [1] : vector<8x128xf32> to vector<8xf32>
    %231 = vector.shape_cast %230 : vector<8xf32> to vector<8x1xf32>
    %232 = tpu.reciprocal %231 {approx = true} : vector<8x1xf32> -> vector<8x1xf32>
    %233 = vector.broadcast %232 : vector<8x1xf32> to vector<8x128xf32>
    %234 = arith.mulf %229, %233 : vector<8x128xf32>
    %c2_70 = arith.constant 2 : index
    %c0_71 = arith.constant 0 : index
    %c0_72 = arith.constant 0 : index
    %235 = vector.load %arg11[%c2_70, %c0_71, %c0_72] : memref<6x8x128xf32, #tpu.memory_space<vmem>>, vector<1x8x128xf32>
    %236 = vector.shape_cast %235 : vector<1x8x128xf32> to vector<8x128xf32>
    %237 = vector.shape_cast %234 : vector<8x128xf32> to vector<1x8x128xf32>
    tpu.vector_store %arg11[%c2_70, %c0_71, %c0_72], %237 {strides = array<i32>} : memref<6x8x128xf32, #tpu.memory_space<vmem>>, vector<1x8x128xf32>,
    %c2_73 = arith.constant 2 : index
    %c0_74 = arith.constant 0 : index
    %c0_75 = arith.constant 0 : index
    %238 = vector.load %arg10[%c2_73, %c0_74, %c0_75] : memref<6x8x128xf32, #tpu.memory_space<vmem>>, vector<1x8x128xf32>
    %239 = vector.shape_cast %238 : vector<1x8x128xf32> to vector<8x128xf32>
    %240 = arith.addf %221, %239 : vector<8x128xf32>
    %cst_76 = arith.constant dense<0.000000e+00> : vector<8x512xf32>
    %241 = tpu.matmul %240, %79, %cst_76 {dimension_numbers = #tpu.dot_dimension_numbers<[1], [0], [0], [1], [0, 0, 1, 1], [], []>} : vector<8x128xf32>, vector<128x512xf32>, vector<8x512xf32> -> vector<8x512xf32>
    %242 = arith.addf %241, %82 : vector<8x512xf32>
    %243 = vector.extract_strided_slice %242 {offsets = [0, 0], sizes = [8, 128], strides = [1, 1]} : vector<8x512xf32> to vector<8x128xf32>
    %244 = arith.negf %243 : vector<8x128xf32>
    %245 = math.exp %244 : vector<8x128xf32>
    %cst_77 = arith.constant 1.000000e+00 : f32
    %246 = vector.broadcast %cst_77 : f32 to vector<8x128xf32>
    %247 = arith.addf %246, %245 : vector<8x128xf32>
    %248 = arith.divf %246, %247 : vector<8x128xf32>
    %249 = vector.extract_strided_slice %242 {offsets = [0, 128], sizes = [8, 128], strides = [1, 1]} : vector<8x512xf32> to vector<8x128xf32>
    %250 = arith.negf %249 : vector<8x128xf32>
    %251 = math.exp %250 : vector<8x128xf32>
    %cst_78 = arith.constant 1.000000e+00 : f32
    %252 = vector.broadcast %cst_78 : f32 to vector<8x128xf32>
    %253 = arith.addf %252, %251 : vector<8x128xf32>
    %254 = arith.divf %252, %253 : vector<8x128xf32>
    %255 = vector.extract_strided_slice %242 {offsets = [0, 256], sizes = [8, 128], strides = [1, 1]} : vector<8x512xf32> to vector<8x128xf32>
    %256 = vector.extract_strided_slice %242 {offsets = [0, 384], sizes = [8, 128], strides = [1, 1]} : vector<8x512xf32> to vector<8x128xf32>
    %257 = arith.mulf %248, %256 : vector<8x128xf32>
    %258 = arith.addf %255, %257 : vector<8x128xf32>
    %259 = math.tanh %258 : vector<8x128xf32>
    %cst_79 = arith.constant 1.000000e+00 : f32
    %260 = vector.broadcast %cst_79 : f32 to vector<8x128xf32>
    %261 = arith.subf %260, %254 : vector<8x128xf32>
    %262 = arith.mulf %261, %259 : vector<8x128xf32>
    %263 = arith.mulf %254, %221 : vector<8x128xf32>
    %264 = arith.addf %262, %263 : vector<8x128xf32>
    %265 = vector.extract_strided_slice %264 {offsets = [0, 0], sizes = [8, 32], strides = [1, 1]} : vector<8x128xf32> to vector<8x32xf32>
    %cst_80 = arith.constant dense<0.000000e+00> : vector<8x128xf32>
    %266 = tpu.matmul %265, %83, %cst_80 {dimension_numbers = #tpu.dot_dimension_numbers<[1], [0], [0], [1], [0, 0, 1, 1], [], []>} : vector<8x32xf32>, vector<32x128xf32>, vector<8x128xf32> -> vector<8x128xf32>
    %267 = arith.addf %266, %86 : vector<8x128xf32>
    %cst_81 = arith.constant dense<0xFF800000> : vector<8xf32>
    %268 = vector.multi_reduction <maximumf>, %267, %cst_81 [1] : vector<8x128xf32> to vector<8xf32>
    %269 = vector.shape_cast %268 : vector<8xf32> to vector<8x1xf32>
    %270 = vector.broadcast %269 : vector<8x1xf32> to vector<8x128xf32>
    %271 = arith.subf %267, %270 : vector<8x128xf32>
    %272 = math.exp %271 : vector<8x128xf32>
    %cst_82 = arith.constant dense<0.000000e+00> : vector<8xf32>
    %273 = vector.multi_reduction <add>, %272, %cst_82 [1] : vector<8x128xf32> to vector<8xf32>
    %274 = vector.shape_cast %273 : vector<8xf32> to vector<8x1xf32>
    %275 = tpu.reciprocal %274 {approx = true} : vector<8x1xf32> -> vector<8x1xf32>
    %276 = vector.broadcast %275 : vector<8x1xf32> to vector<8x128xf32>
    %277 = arith.mulf %272, %276 : vector<8x128xf32>
    %c3_83 = arith.constant 3 : index
    %c0_84 = arith.constant 0 : index
    %c0_85 = arith.constant 0 : index
    %278 = vector.load %arg11[%c3_83, %c0_84, %c0_85] : memref<6x8x128xf32, #tpu.memory_space<vmem>>, vector<1x8x128xf32>
    %279 = vector.shape_cast %278 : vector<1x8x128xf32> to vector<8x128xf32>
    %280 = vector.shape_cast %277 : vector<8x128xf32> to vector<1x8x128xf32>
    tpu.vector_store %arg11[%c3_83, %c0_84, %c0_85], %280 {strides = array<i32>} : memref<6x8x128xf32, #tpu.memory_space<vmem>>, vector<1x8x128xf32>,
    %c3_86 = arith.constant 3 : index
    %c0_87 = arith.constant 0 : index
    %c0_88 = arith.constant 0 : index
    %281 = vector.load %arg10[%c3_86, %c0_87, %c0_88] : memref<6x8x128xf32, #tpu.memory_space<vmem>>, vector<1x8x128xf32>
    %282 = vector.shape_cast %281 : vector<1x8x128xf32> to vector<8x128xf32>
    %283 = arith.addf %264, %282 : vector<8x128xf32>
    %cst_89 = arith.constant dense<0.000000e+00> : vector<8x512xf32>
    %284 = tpu.matmul %283, %79, %cst_89 {dimension_numbers = #tpu.dot_dimension_numbers<[1], [0], [0], [1], [0, 0, 1, 1], [], []>} : vector<8x128xf32>, vector<128x512xf32>, vector<8x512xf32> -> vector<8x512xf32>
    %285 = arith.addf %284, %82 : vector<8x512xf32>
    %286 = vector.extract_strided_slice %285 {offsets = [0, 0], sizes = [8, 128], strides = [1, 1]} : vector<8x512xf32> to vector<8x128xf32>
    %287 = arith.negf %286 : vector<8x128xf32>
    %288 = math.exp %287 : vector<8x128xf32>
    %cst_90 = arith.constant 1.000000e+00 : f32
    %289 = vector.broadcast %cst_90 : f32 to vector<8x128xf32>
    %290 = arith.addf %289, %288 : vector<8x128xf32>
    %291 = arith.divf %289, %290 : vector<8x128xf32>
    %292 = vector.extract_strided_slice %285 {offsets = [0, 128], sizes = [8, 128], strides = [1, 1]} : vector<8x512xf32> to vector<8x128xf32>
    %293 = arith.negf %292 : vector<8x128xf32>
    %294 = math.exp %293 : vector<8x128xf32>
    %cst_91 = arith.constant 1.000000e+00 : f32
    %295 = vector.broadcast %cst_91 : f32 to vector<8x128xf32>
    %296 = arith.addf %295, %294 : vector<8x128xf32>
    %297 = arith.divf %295, %296 : vector<8x128xf32>
    %298 = vector.extract_strided_slice %285 {offsets = [0, 256], sizes = [8, 128], strides = [1, 1]} : vector<8x512xf32> to vector<8x128xf32>
    %299 = vector.extract_strided_slice %285 {offsets = [0, 384], sizes = [8, 128], strides = [1, 1]} : vector<8x512xf32> to vector<8x128xf32>
    %300 = arith.mulf %291, %299 : vector<8x128xf32>
    %301 = arith.addf %298, %300 : vector<8x128xf32>
    %302 = math.tanh %301 : vector<8x128xf32>
    %cst_92 = arith.constant 1.000000e+00 : f32
    %303 = vector.broadcast %cst_92 : f32 to vector<8x128xf32>
    %304 = arith.subf %303, %297 : vector<8x128xf32>
    %305 = arith.mulf %304, %302 : vector<8x128xf32>
    %306 = arith.mulf %297, %264 : vector<8x128xf32>
    %307 = arith.addf %305, %306 : vector<8x128xf32>
    %308 = vector.extract_strided_slice %307 {offsets = [0, 0], sizes = [8, 32], strides = [1, 1]} : vector<8x128xf32> to vector<8x32xf32>
    %cst_93 = arith.constant dense<0.000000e+00> : vector<8x128xf32>
    %309 = tpu.matmul %308, %83, %cst_93 {dimension_numbers = #tpu.dot_dimension_numbers<[1], [0], [0], [1], [0, 0, 1, 1], [], []>} : vector<8x32xf32>, vector<32x128xf32>, vector<8x128xf32> -> vector<8x128xf32>
    %310 = arith.addf %309, %86 : vector<8x128xf32>
    %cst_94 = arith.constant dense<0xFF800000> : vector<8xf32>
    %311 = vector.multi_reduction <maximumf>, %310, %cst_94 [1] : vector<8x128xf32> to vector<8xf32>
    %312 = vector.shape_cast %311 : vector<8xf32> to vector<8x1xf32>
    %313 = vector.broadcast %312 : vector<8x1xf32> to vector<8x128xf32>
    %314 = arith.subf %310, %313 : vector<8x128xf32>
    %315 = math.exp %314 : vector<8x128xf32>
    %cst_95 = arith.constant dense<0.000000e+00> : vector<8xf32>
    %316 = vector.multi_reduction <add>, %315, %cst_95 [1] : vector<8x128xf32> to vector<8xf32>
    %317 = vector.shape_cast %316 : vector<8xf32> to vector<8x1xf32>
    %318 = tpu.reciprocal %317 {approx = true} : vector<8x1xf32> -> vector<8x1xf32>
    %319 = vector.broadcast %318 : vector<8x1xf32> to vector<8x128xf32>
    %320 = arith.mulf %315, %319 : vector<8x128xf32>
    %c4 = arith.constant 4 : index
    %c0_96 = arith.constant 0 : index
    %c0_97 = arith.constant 0 : index
    %321 = vector.load %arg11[%c4, %c0_96, %c0_97] : memref<6x8x128xf32, #tpu.memory_space<vmem>>, vector<1x8x128xf32>
    %322 = vector.shape_cast %321 : vector<1x8x128xf32> to vector<8x128xf32>
    %323 = vector.shape_cast %320 : vector<8x128xf32> to vector<1x8x128xf32>
    tpu.vector_store %arg11[%c4, %c0_96, %c0_97], %323 {strides = array<i32>} : memref<6x8x128xf32, #tpu.memory_space<vmem>>, vector<1x8x128xf32>,
    %324 = vector.broadcast %312 : vector<8x1xf32> to vector<8x128xf32>
    %325 = arith.cmpf oge, %310, %324 : vector<8x128xf32>
    %c128_i32_98 = arith.constant 128 : i32
    %326 = vector.broadcast %c128_i32_98 : i32 to vector<8x128xi32>
    %327 = arith.select %325, %78, %326 : vector<8x128xi1>, vector<8x128xi32>
    %cst_99 = arith.constant dense<2147483647> : vector<8xi32>
    %328 = vector.multi_reduction <minsi>, %327, %cst_99 [1] : vector<8x128xi32> to vector<8xi32>
    %329 = vector.shape_cast %328 : vector<8xi32> to vector<8x1xi32>
    %c32_i32_100 = arith.constant 32 : i32
    %330 = vector.broadcast %c32_i32_100 : i32 to vector<8x1xi32>
    %331 = arith.addi %329, %330 : vector<8x1xi32>
    %332 = vector.broadcast %331 : vector<8x1xi32> to vector<8x128xi32>
    %333 = arith.cmpi eq, %78, %332 : vector<8x128xi32>
    %334 = arith.extui %333 : vector<8x128xi1> to vector<8x128xi32>
    %335 = arith.sitofp %334 : vector<8x128xi32> to vector<8x128xf32>
    %336 = arith.addf %307, %335 : vector<8x128xf32>
    %cst_101 = arith.constant dense<0.000000e+00> : vector<8x512xf32>
    %337 = tpu.matmul %336, %79, %cst_101 {dimension_numbers = #tpu.dot_dimension_numbers<[1], [0], [0], [1], [0, 0, 1, 1], [], []>} : vector<8x128xf32>, vector<128x512xf32>, vector<8x512xf32> -> vector<8x512xf32>
    %338 = arith.addf %337, %82 : vector<8x512xf32>
    %339 = vector.extract_strided_slice %338 {offsets = [0, 0], sizes = [8, 128], strides = [1, 1]} : vector<8x512xf32> to vector<8x128xf32>
    %340 = arith.negf %339 : vector<8x128xf32>
    %341 = math.exp %340 : vector<8x128xf32>
    %cst_102 = arith.constant 1.000000e+00 : f32
    %342 = vector.broadcast %cst_102 : f32 to vector<8x128xf32>
    %343 = arith.addf %342, %341 : vector<8x128xf32>
    %344 = arith.divf %342, %343 : vector<8x128xf32>
    %345 = vector.extract_strided_slice %338 {offsets = [0, 128], sizes = [8, 128], strides = [1, 1]} : vector<8x512xf32> to vector<8x128xf32>
    %346 = arith.negf %345 : vector<8x128xf32>
    %347 = math.exp %346 : vector<8x128xf32>
    %cst_103 = arith.constant 1.000000e+00 : f32
    %348 = vector.broadcast %cst_103 : f32 to vector<8x128xf32>
    %349 = arith.addf %348, %347 : vector<8x128xf32>
    %350 = arith.divf %348, %349 : vector<8x128xf32>
    %351 = vector.extract_strided_slice %338 {offsets = [0, 256], sizes = [8, 128], strides = [1, 1]} : vector<8x512xf32> to vector<8x128xf32>
    %352 = vector.extract_strided_slice %338 {offsets = [0, 384], sizes = [8, 128], strides = [1, 1]} : vector<8x512xf32> to vector<8x128xf32>
    %353 = arith.mulf %344, %352 : vector<8x128xf32>
    %354 = arith.addf %351, %353 : vector<8x128xf32>
    %355 = math.tanh %354 : vector<8x128xf32>
    %cst_104 = arith.constant 1.000000e+00 : f32
    %356 = vector.broadcast %cst_104 : f32 to vector<8x128xf32>
    %357 = arith.subf %356, %350 : vector<8x128xf32>
    %358 = arith.mulf %357, %355 : vector<8x128xf32>
    %359 = arith.mulf %350, %307 : vector<8x128xf32>
    %360 = arith.addf %358, %359 : vector<8x128xf32>
    %361 = vector.extract_strided_slice %360 {offsets = [0, 0], sizes = [8, 32], strides = [1, 1]} : vector<8x128xf32> to vector<8x32xf32>
    %cst_105 = arith.constant dense<0.000000e+00> : vector<8x128xf32>
    %362 = tpu.matmul %361, %83, %cst_105 {dimension_numbers = #tpu.dot_dimension_numbers<[1], [0], [0], [1], [0, 0, 1, 1], [], []>} : vector<8x32xf32>, vector<32x128xf32>, vector<8x128xf32> -> vector<8x128xf32>
    %363 = arith.addf %362, %86 : vector<8x128xf32>
    %cst_106 = arith.constant dense<0xFF800000> : vector<8xf32>
    %364 = vector.multi_reduction <maximumf>, %363, %cst_106 [1] : vector<8x128xf32> to vector<8xf32>
    %365 = vector.shape_cast %364 : vector<8xf32> to vector<8x1xf32>
    %366 = vector.broadcast %365 : vector<8x1xf32> to vector<8x128xf32>
    %367 = arith.subf %363, %366 : vector<8x128xf32>
    %368 = math.exp %367 : vector<8x128xf32>
    %cst_107 = arith.constant dense<0.000000e+00> : vector<8xf32>
    %369 = vector.multi_reduction <add>, %368, %cst_107 [1] : vector<8x128xf32> to vector<8xf32>
    %370 = vector.shape_cast %369 : vector<8xf32> to vector<8x1xf32>
    %371 = tpu.reciprocal %370 {approx = true} : vector<8x1xf32> -> vector<8x1xf32>
    %372 = vector.broadcast %371 : vector<8x1xf32> to vector<8x128xf32>
    %373 = arith.mulf %368, %372 : vector<8x128xf32>
    %c5 = arith.constant 5 : index
    %c0_108 = arith.constant 0 : index
    %c0_109 = arith.constant 0 : index
    %374 = vector.load %arg11[%c5, %c0_108, %c0_109] : memref<6x8x128xf32, #tpu.memory_space<vmem>>, vector<1x8x128xf32>
    %375 = vector.shape_cast %374 : vector<1x8x128xf32> to vector<8x128xf32>
    %376 = vector.shape_cast %373 : vector<8x128xf32> to vector<1x8x128xf32>
    tpu.vector_store %arg11[%c5, %c0_108, %c0_109], %376 {strides = array<i32>} : memref<6x8x128xf32, #tpu.memory_space<vmem>>, vector<1x8x128xf32>,
    return
  }
}

</mosaic_0001>

<llo_original>
// kernel: kgcvae_forward.1
$region0: #{kgcvae_forward.1}
  #allocation0 [shape = 'u32[]', space=smem, size = 0x4, offset = 0x4, fixed_abs, tag = 'smem constant byte address 0x4 - core index']
  #allocation1 [shape = 'u32[144,128]{1,0:T(1,128)}', space=vmem, size = 0x12000, scoped, tag = 'internal scratch']
  %s0 = inlined_call_operand.vmem [shape: f32[2,8,128], index: 0, kind: input, shape index: {}]
  %s1 = inlined_call_operand.vmem [shape: f32[32,64], index: 1, kind: input, shape index: {}]
  %s2 = inlined_call_operand.vmem [shape: f32[64,512], index: 2, kind: input, shape index: {}]
  %s3 = inlined_call_operand.vmem [shape: f32[64,64], index: 3, kind: input, shape index: {}]
  %s4 = inlined_call_operand.vmem [shape: f32[64,256], index: 4, kind: input, shape index: {}]
  %s5 = inlined_call_operand.vmem [shape: f32[4,512], index: 5, kind: input, shape index: {}]
  %s6 = inlined_call_operand.vmem [shape: f32[128,512], index: 6, kind: input, shape index: {}]
  %s7 = inlined_call_operand.vmem [shape: f32[1,512], index: 7, kind: input, shape index: {}]
  %s8 = inlined_call_operand.vmem [shape: f32[32,128], index: 8, kind: input, shape index: {}]
  %s9 = inlined_call_operand.vmem [shape: f32[1,128], index: 9, kind: input, shape index: {}]
  %s10 = inlined_call_operand.vmem [shape: f32[6,8,128], index: 10, kind: input, shape index: {}]
  %s11 = inlined_call_operand.vmem [shape: f32[6,8,128], index: 11, kind: output, shape index: {0}]
  %s12 = inlined_call_operand.vmem [shape: f32[8,128], index: 12, kind: output, shape index: {1}]
  %13 = xla_tuple %s11, %s12
  %s14 = sld [smem:[#allocation0]]
  $region62: #{kgcvae_forward.1} parent=0
    _
  %s16 = ssub.s32 1, %s14
  %s17 = scalar_select 0, %s16, %s14
  // Predicated region
  $region2: #{kgcvae_forward.1} parent=0 // pred_check
    _
  $region3: #{kgcvae_forward.1} parent=0 // pred_check_branch
    %19 = sbr.rel (0) target = $region5
  $region4: #{kgcvae_forward.1} parent=0 // pred_region
    _
  $region5: #{kgcvae_forward.1} parent=0 // pred_fallthru
    _
  // Predicated region
  $region6: #{kgcvae_forward.1} parent=0 // pred_check
    _
  $region7: #{kgcvae_forward.1} parent=0 // pred_check_branch
    %21 = sbr.rel (0) target = $region9
  $region8: #{kgcvae_forward.1} parent=0 // pred_region
    _
  $region9: #{kgcvae_forward.1} parent=0 // pred_fallthru
    _
  // Predicated region
  $region10: #{kgcvae_forward.1} parent=0 // pred_check
    _
  $region11: #{kgcvae_forward.1} parent=0 // pred_check_branch
    %23 = sbr.rel (0) target = $region13
  $region12: #{kgcvae_forward.1} parent=0 // pred_region
    _
  $region13: #{kgcvae_forward.1} parent=0 // pred_fallthru
    _
  // Predicated region
  $region14: #{kgcvae_forward.1} parent=0 // pred_check
    _
  $region15: #{kgcvae_forward.1} parent=0 // pred_check_branch
    %25 = sbr.rel (0) target = $region17
  $region16: #{kgcvae_forward.1} parent=0 // pred_region
    _
  $region17: #{kgcvae_forward.1} parent=0 // pred_fallthru
    _
  // Predicated region
  $region18: #{kgcvae_forward.1} parent=0 // pred_check
    _
  $region19: #{kgcvae_forward.1} parent=0 // pred_check_branch
    %27 = sbr.rel (0) target = $region21
  $region20: #{kgcvae_forward.1} parent=0 // pred_region
    _
  $region21: #{kgcvae_forward.1} parent=0 // pred_fallthru
    _
  // Predicated region
  $region22: #{kgcvae_forward.1} parent=0 // pred_check
    _
  $region23: #{kgcvae_forward.1} parent=0 // pred_check_branch
    %29 = sbr.rel (0) target = $region25
  $region24: #{kgcvae_forward.1} parent=0 // pred_region
    _
  $region25: #{kgcvae_forward.1} parent=0 // pred_fallthru
    _
  // Predicated region
  $region26: #{kgcvae_forward.1} parent=0 // pred_check
    _
  $region27: #{kgcvae_forward.1} parent=0 // pred_check_branch
    %31 = sbr.rel (0) target = $region29
  $region28: #{kgcvae_forward.1} parent=0 // pred_region
    _
  $region29: #{kgcvae_forward.1} parent=0 // pred_fallthru
    _
  // Predicated region
  $region30: #{kgcvae_forward.1} parent=0 // pred_check
    _
  $region31: #{kgcvae_forward.1} parent=0 // pred_check_branch
    %33 = sbr.rel (0) target = $region33
  $region32: #{kgcvae_forward.1} parent=0 // pred_region
    _
  $region33: #{kgcvae_forward.1} parent=0 // pred_fallthru
    _
  // Predicated region
  $region34: #{kgcvae_forward.1} parent=0 // pred_check
    _
  $region35: #{kgcvae_forward.1} parent=0 // pred_check_branch
    %35 = sbr.rel (0) target = $region37
  $region36: #{kgcvae_forward.1} parent=0 // pred_region
    _
  $region37: #{kgcvae_forward.1} parent=0 // pred_fallthru
    _
  // Predicated region
  $region38: #{kgcvae_forward.1} parent=0 // pred_check
    _
  $region39: #{kgcvae_forward.1} parent=0 // pred_check_branch
    %37 = sbr.rel (0) target = $region41
  $region40: #{kgcvae_forward.1} parent=0 // pred_region
    _
  $region41: #{kgcvae_forward.1} parent=0 // pred_fallthru
    _
  // Predicated region
  $region42: #{kgcvae_forward.1} parent=0 // pred_check
    _
  $region43: #{kgcvae_forward.1} parent=0 // pred_check_branch
    %39 = sbr.rel (0) target = $region45
  $region44: #{kgcvae_forward.1} parent=0 // pred_region
    _
  $region45: #{kgcvae_forward.1} parent=0 // pred_fallthru
    _
  %v40 = vld [vmem:[%s0] sm:$0xff]
  %s41 = scalar_lea.vmem %s0, 8
  %v42 = vld [vmem:[%s41] sm:$0xff]
  %v43 = vld [vmem:[%s1] sm:$0xff]
  %v44 = vld [vmem:[%s1 + $0x8] sm:$0xff]
  %v45 = vld [vmem:[%s1 + $0x10] sm:$0xff]
  %v46 = vld [vmem:[%s1 + $0x18] sm:$0xff]
  %v47 = vld [vmem:[%s5] sm:$0x1]
  %v48 = vlaneseq
  %v49 = vshrl.u32 %v48, 7
  %v50 = vsub.s32 0, %v49
  %v51 = vrot.slane %v47, %v50
  %vm52 = vcmask 261120
  %v54 = vsel %vm52, %v40, 0
  %56 = vmatprep.subr.mxu0 0.0
  %57 = vmatpush1.msra.mxu0 %v43
  %58 = vmatprep.subr.mxu0 0.0
  %59 = vmatpush1.msra.mxu0 %v44
  %60 = vmatprep.subr.mxu0 0.0
  %61 = vmatpush1.msra.mxu0 %v45
  %62 = vmatprep.subr.mxu0 0.0
  %63 = vmatpush1.msra.mxu0 %v46
  %64 = vmatprep.subr.mxu0 0.0
  %65 = vmatpush1.msra.mxu0 0.0
  %66 = vmatprep.subr.mxu0 0.0
  %67 = vmatpush1.msra.mxu0 0.0
  %68 = vmatprep.subr.mxu0 0.0
  %69 = vmatpush1.msra.mxu0 0.0
  %70 = vmatprep.subr.mxu0 0.0
  %71 = vmatpush1.msra.mxu0 0.0
  %72 = vmatprep.subr.mxu0 0.0
  %73 = vmatpush1.msra.mxu0 0.0
  %74 = vmatprep.subr.mxu0 0.0
  %75 = vmatpush1.msra.mxu0 0.0
  %76 = vmatprep.subr.mxu0 0.0
  %77 = vmatpush1.msra.mxu0 0.0
  %78 = vmatprep.subr.mxu0 0.0
  %79 = vmatpush1.msra.mxu0 0.0
  %80 = vmatprep.subr.mxu0 0.0
  %81 = vmatpush1.msra.mxu0 0.0
  %82 = vmatprep.subr.mxu0 0.0
  %83 = vmatpush1.msra.mxu0 0.0
  %84 = vmatprep.subr.mxu0 0.0
  %85 = vmatpush1.msra.mxu0 0.0
  %86 = vmatprep.subr.mxu0 0.0
  %87 = vmatpush1.msra.mxu0 0.0
  %88 = vmatprep.subr.mxu0 0.0
  %89 = vmatpush1.msra.mxu0 0.0
  %90 = vmatprep.subr.mxu0 0.0
  %91 = vmatpush1.msra.mxu0 0.0
  %92 = vmatprep.subr.mxu0 0.0
  %93 = vmatpush1.msra.mxu0 0.0
  %94 = vmatprep.subr.mxu0 0.0
  %95 = vmatpush1.msra.mxu0 0.0
  %96 = vmatprep.subr.mxu0 0.0
  %97 = vmatpush1.msra.mxu0 0.0
  %98 = vmatprep.subr.mxu0 0.0
  %99 = vmatpush1.msra.mxu0 0.0
  %100 = vmatprep.subr.mxu0 0.0
  %101 = vmatpush1.msra.mxu0 0.0
  %102 = vmatprep.subr.mxu0 0.0
  %103 = vmatpush1.msra.mxu0 0.0
  %104 = vmatprep.subr.mxu0 0.0
  %105 = vmatpush1.msra.mxu0 0.0
  %106 = vmatprep.subr.mxu0 0.0
  %107 = vmatpush1.msra.mxu0 0.0
  %108 = vmatprep.subr.mxu0 0.0
  %109 = vmatpush1.msra.mxu0 0.0
  %110 = vmatprep.subr.mxu0 0.0
  %111 = vmatpush1.msra.mxu0 0.0
  %112 = vmatprep.subr.mxu0 0.0
  %113 = vmatpush1.msra.mxu0 0.0
  %114 = vmatprep.subr.mxu0 0.0
  %115 = vmatpush1.msra.mxu0 0.0
  %116 = vmatprep.subr.mxu0 0.0
  %117 = vmatpush1.msra.mxu0 0.0
  %118 = vmatprep.subr.mxu0 0.0
  %119 = vmatpush1.msra.mxu0 0.0
  %120 = vmatprep.mubr.f32.mxu0 0.0
  %121 = vmatmul.mubr.f32.gmra.mrb[0].mxu0 %v54
  %v122 = vpop.f32.mrb[0].mxu0
  %v123 = vadd.f32 %v51, %v122
  %v124 = vpop.f32.mrb[0].mxu0
  %125 = vdwg.mxu0
  %v126 = vtanh.pop %v123
  %v127 = vld [vmem:[%s2] sm:$0xff]
  %v128 = vld [vmem:[%s2 + $0x8] sm:$0xff]
  %v129 = vld [vmem:[%s2 + $0x10] sm:$0xff]
  %v130 = vld [vmem:[%s2 + $0x18] sm:$0xff]
  %v131 = vld [vmem:[%s2 + $0x20] sm:$0xff]
  %v132 = vld [vmem:[%s2 + $0x28] sm:$0xff]
  %v133 = vld [vmem:[%s2 + $0x30] sm:$0xff]
  %v134 = vld [vmem:[%s2 + $0x38] sm:$0xff]
  %v135 = vld [vmem:[%s2 + $0x40] sm:$0xff]
  %v136 = vld [vmem:[%s2 + $0x48] sm:$0xff]
  %v137 = vld [vmem:[%s2 + $0x50] sm:$0xff]
  %v138 = vld [vmem:[%s2 + $0x58] sm:$0xff]
  %v139 = vld [vmem:[%s2 + $0x60] sm:$0xff]
  %v140 = vld [vmem:[%s2 + $0x68] sm:$0xff]
  %v141 = vld [vmem:[%s2 + $0x70] sm:$0xff]
  %v142 = vld [vmem:[%s2 + $0x78] sm:$0xff]
  %v143 = vld [vmem:[%s2 + $0x80] sm:$0xff]
  %v144 = vld [vmem:[%s2 + $0x88] sm:$0xff]
  %v145 = vld [vmem:[%s2 + $0x90] sm:$0xff]
  %v146 = vld [vmem:[%s2 + $0x98] sm:$0xff]
  %v147 = vld [vmem:[%s2 + $0xa0] sm:$0xff]
  %v148 = vld [vmem:[%s2 + $0xa8] sm:$0xff]
  %v149 = vld [vmem:[%s2 + $0xb0] sm:$0xff]
  %v150 = vld [vmem:[%s2 + $0xb8] sm:$0xff]
  %v151 = vld [vmem:[%s2 + $0xc0] sm:$0xff]
  %v152 = vld [vmem:[%s2 + $0xc8] sm:$0xff]
  %v153 = vld [vmem:[%s2 + $0xd0] sm:$0xff]
  %v154 = vld [vmem:[%s2 + $0xd8] sm:$0xff]
  %v155 = vld [vmem:[%s2 + $0xe0] sm:$0xff]
  %v156 = vld [vmem:[%s2 + $0xe8] sm:$0xff]
  %v157 = vld [vmem:[%s2 + $0xf0] sm:$0xff]
  %v158 = vld [vmem:[%s2 + $0xf8] sm:$0xff]
  %s159 = scalar_lea.vmem %s5, 1
  %v160 = vld [vmem:[%s159] ss:$4 sm:$0xf]
  %v162 = vlaneseq
  %v163 = vshrl.u32 %v162, 7
  %v164 = vsub.s32 0, %v163
  %v165 = vrot.slane %v160, %v164
  %v166 = vlaneseq
  %v167 = vshrl.u32 %v166, 7
  %v168 = vsub.s32 1, %v167
  %v169 = vrot.slane %v160, %v168
  %v170 = vlaneseq
  %v171 = vshrl.u32 %v170, 7
  %v172 = vsub.s32 2, %v171
  %v173 = vrot.slane %v160, %v172
  %v174 = vlaneseq
  %v175 = vshrl.u32 %v174, 7
  %v176 = vsub.s32 3, %v175
  %v177 = vrot.slane %v160, %v176
  %vm182 = vcmask 523264
  %v184 = vsel %vm182, %v126, 0
  %186 = vmatprep.subr.mxu0 %v128
  %187 = vmatpush1.msra.mxu0 %v127
  %188 = vmatprep.subr.mxu0 %v132
  %189 = vmatpush1.msra.mxu0 %v131
  %190 = vmatprep.subr.mxu0 %v136
  %191 = vmatpush1.msra.mxu0 %v135
  %192 = vmatprep.subr.mxu0 %v140
  %193 = vmatpush1.msra.mxu0 %v139
  %194 = vmatprep.subr.mxu0 %v144
  %195 = vmatpush1.msra.mxu0 %v143
  %196 = vmatprep.subr.mxu0 %v148
  %197 = vmatpush1.msra.mxu0 %v147
  %198 = vmatprep.subr.mxu0 %v152
  %199 = vmatpush1.msra.mxu0 %v151
  %200 = vmatprep.subr.mxu0 %v156
  %201 = vmatpush1.msra.mxu0 %v155
  %202 = vmatprep.subr.mxu0 0.0
  %203 = vmatpush1.msra.mxu0 0.0
  %204 = vmatprep.subr.mxu0 0.0
  %205 = vmatpush1.msra.mxu0 0.0
  %206 = vmatprep.subr.mxu0 0.0
  %207 = vmatpush1.msra.mxu0 0.0
  %208 = vmatprep.subr.mxu0 0.0
  %209 = vmatpush1.msra.mxu0 0.0
  %210 = vmatprep.subr.mxu0 0.0
  %211 = vmatpush1.msra.mxu0 0.0
  %212 = vmatprep.subr.mxu0 0.0
  %213 = vmatpush1.msra.mxu0 0.0
  %214 = vmatprep.subr.mxu0 0.0
  %215 = vmatpush1.msra.mxu0 0.0
  %216 = vmatprep.subr.mxu0 0.0
  %217 = vmatpush1.msra.mxu0 0.0
  %218 = vmatprep.subr.mxu0 0.0
  %219 = vmatpush1.msra.mxu0 0.0
  %220 = vmatprep.subr.mxu0 0.0
  %221 = vmatpush1.msra.mxu0 0.0
  %222 = vmatprep.subr.mxu0 0.0
  %223 = vmatpush1.msra.mxu0 0.0
  %224 = vmatprep.subr.mxu0 0.0
  %225 = vmatpush1.msra.mxu0 0.0
  %226 = vmatprep.subr.mxu0 0.0
  %227 = vmatpush1.msra.mxu0 0.0
  %228 = vmatprep.subr.mxu0 0.0
  %229 = vmatpush1.msra.mxu0 0.0
  %230 = vmatprep.subr.mxu0 0.0
  %231 = vmatpush1.msra.mxu0 0.0
  %232 = vmatprep.subr.mxu0 0.0
  %233 = vmatpush1.msra.mxu0 0.0
  %234 = vmatprep.subr.mxu0 0.0
  %235 = vmatpush1.msra.mxu0 0.0
  %236 = vmatprep.subr.mxu0 0.0
  %237 = vmatpush1.msra.mxu0 0.0
  %238 = vmatprep.subr.mxu0 0.0
  %239 = vmatpush1.msra.mxu0 0.0
  %240 = vmatprep.subr.mxu0 0.0
  %241 = vmatpush1.msra.mxu0 0.0
  %242 = vmatprep.subr.mxu0 0.0
  %243 = vmatpush1.msra.mxu0 0.0
  %244 = vmatprep.subr.mxu0 0.0
  %245 = vmatpush1.msra.mxu0 0.0
  %246 = vmatprep.subr.mxu0 0.0
  %247 = vmatpush1.msra.mxu0 0.0
  %248 = vmatprep.subr.mxu0 0.0
  %249 = vmatpush1.msra.mxu0 0.0
  %250 = vmatprep.mubr.f32.mxu0 0.0
  %251 = vmatmul.mubr.f32.gmra.mrb[0].mxu0 %v184
  %v252 = vpop.f32.mrb[0].mxu0
  %v253 = vadd.f32 %v165, %v252
  %v254 = vpop.f32.mrb[0].mxu0
  %v255 = vadd.f32 %v169, %v254
  %256 = vdwg.mxu0
  %257 = vmatprep.subr.mxu0 %v130
  %258 = vmatpush1.msra.mxu0 %v129
  %259 = vmatprep.subr.mxu0 %v134
  %260 = vmatpush1.msra.mxu0 %v133
  %261 = vmatprep.subr.mxu0 %v138
  %262 = vmatpush1.msra.mxu0 %v137
  %263 = vmatprep.subr.mxu0 %v142
  %264 = vmatpush1.msra.mxu0 %v141
  %265 = vmatprep.subr.mxu0 %v146
  %266 = vmatpush1.msra.mxu0 %v145
  %267 = vmatprep.subr.mxu0 %v150
  %268 = vmatpush1.msra.mxu0 %v149
  %269 = vmatprep.subr.mxu0 %v154
  %270 = vmatpush1.msra.mxu0 %v153
  %271 = vmatprep.subr.mxu0 %v158
  %272 = vmatpush1.msra.mxu0 %v157
  %273 = vmatprep.subr.mxu0 0.0
  %274 = vmatpush1.msra.mxu0 0.0
  %275 = vmatprep.subr.mxu0 0.0
  %276 = vmatpush1.msra.mxu0 0.0
  %277 = vmatprep.subr.mxu0 0.0
  %278 = vmatpush1.msra.mxu0 0.0
  %279 = vmatprep.subr.mxu0 0.0
  %280 = vmatpush1.msra.mxu0 0.0
  %281 = vmatprep.subr.mxu0 0.0
  %282 = vmatpush1.msra.mxu0 0.0
  %283 = vmatprep.subr.mxu0 0.0
  %284 = vmatpush1.msra.mxu0 0.0
  %285 = vmatprep.subr.mxu0 0.0
  %286 = vmatpush1.msra.mxu0 0.0
  %287 = vmatprep.subr.mxu0 0.0
  %288 = vmatpush1.msra.mxu0 0.0
  %289 = vmatprep.subr.mxu0 0.0
  %290 = vmatpush1.msra.mxu0 0.0
  %291 = vmatprep.subr.mxu0 0.0
  %292 = vmatpush1.msra.mxu0 0.0
  %293 = vmatprep.subr.mxu0 0.0
  %294 = vmatpush1.msra.mxu0 0.0
  %295 = vmatprep.subr.mxu0 0.0
  %296 = vmatpush1.msra.mxu0 0.0
  %297 = vmatprep.subr.mxu0 0.0
  %298 = vmatpush1.msra.mxu0 0.0
  %299 = vmatprep.subr.mxu0 0.0
  %300 = vmatpush1.msra.mxu0 0.0
  %301 = vmatprep.subr.mxu0 0.0
  %302 = vmatpush1.msra.mxu0 0.0
  %303 = vmatprep.subr.mxu0 0.0
  %304 = vmatpush1.msra.mxu0 0.0
  %305 = vmatprep.subr.mxu0 0.0
  %306 = vmatpush1.msra.mxu0 0.0
  %307 = vmatprep.subr.mxu0 0.0
  %308 = vmatpush1.msra.mxu0 0.0
  %309 = vmatprep.subr.mxu0 0.0
  %310 = vmatpush1.msra.mxu0 0.0
  %311 = vmatprep.subr.mxu0 0.0
  %312 = vmatpush1.msra.mxu0 0.0
  %313 = vmatprep.subr.mxu0 0.0
  %314 = vmatpush1.msra.mxu0 0.0
  %315 = vmatprep.subr.mxu0 0.0
  %316 = vmatpush1.msra.mxu0 0.0
  %317 = vmatprep.subr.mxu0 0.0
  %318 = vmatpush1.msra.mxu0 0.0
  %319 = vmatprep.subr.mxu0 0.0
  %320 = vmatpush1.msra.mxu0 0.0
  %321 = vmatprep.mubr.f32.mxu0 0.0
  %322 = vmatmul.mubr.f32.gmra.mrb[0].mxu0 %v184
  %v323 = vpop.f32.mrb[0].mxu0
  %v324 = vadd.f32 %v173, %v323
  %v325 = vpop.f32.mrb[0].mxu0
  %v326 = vadd.f32 %v177, %v325
  %327 = vdwg.mxu0
  %v328 = vmul.f32 %v255, 0.5
  %v329 = vmul.f32 %v328, 1.442695
  %v330 = vpow.pop %v329
  %v331 = vmul.f32 %v330, %v42
  %v332 = vadd.f32 %v253, %v331
  %v333 = vsub.f32 %v326, %v255
  %v334 = vmul.f32 %v255, 1.442695
  %v335 = vpow.pop %v334
  %v336 = vsub.f32 %v253, %v324
  %v337 = vmul.f32 %v336, %v336
  %v338 = vadd.f32 %v335, %v337
  %v339 = vsub.f32 0.0, %v326
  %v340 = vmul.f32 %v339, 1.442695
  %v341 = vpow.pop %v340
  %v342 = vmul.f32 %v338, %v341
  %v343 = vadd.f32 %v333, %v342
  %v344 = vsub.f32 %v343, 1.0
  %v345 = vmul.f32 %v344, 0.5
  %v346 = vlaneseq
  %v347 = vshrl.u32 %v346, 7
  %vm348 = vcmp.lt.s32.totalorder %v347, 2
  %v349 = vsel %vm348, %v345, 0.0
  %350 = vadd.xlane.f32.xlu0 %v349
  %v351 = vpop.xlane.xlu0 %350
  %v352 = vrot.slane %v351, 4
  %v353 = vadd.f32 %v351, %v352
  %v354 = vrot.slane %v353, 2
  %v355 = vadd.f32 %v353, %v354
  %v356 = vrot.slane %v355, 1
  %v357 = vadd.f32 %v355, %v356
  %s358 = vtos %v357
  %360 = vrot.lane.b32.xlu0 %v332, 32
  %v361 = vpop.permute.xlu0 %360
  %v363 = vsel %vm52, %v126, %v361
  %v364 = vld [vmem:[%s3] sm:$0xff]
  %v365 = vld [vmem:[%s3 + $0x8] sm:$0xff]
  %v366 = vld [vmem:[%s3 + $0x10] sm:$0xff]
  %v367 = vld [vmem:[%s3 + $0x18] sm:$0xff]
  %v368 = vld [vmem:[%s3 + $0x20] sm:$0xff]
  %v369 = vld [vmem:[%s3 + $0x28] sm:$0xff]
  %v370 = vld [vmem:[%s3 + $0x30] sm:$0xff]
  %v371 = vld [vmem:[%s3 + $0x38] sm:$0xff]
  %v372 = vld [vmem:[%s5 + $0x2] sm:$0x1]
  %v373 = vlaneseq
  %v374 = vshrl.u32 %v373, 7
  %v375 = vsub.s32 0, %v374
  %v376 = vrot.slane %v372, %v375
  %v378 = vsel %vm182, %v363, 0
  %380 = vmatprep.subr.mxu0 0.0
  %381 = vmatpush1.msra.mxu0 %v364
  %382 = vmatprep.subr.mxu0 0.0
  %383 = vmatpush1.msra.mxu0 %v365
  %384 = vmatprep.subr.mxu0 0.0
  %385 = vmatpush1.msra.mxu0 %v366
  %386 = vmatprep.subr.mxu0 0.0
  %387 = vmatpush1.msra.mxu0 %v367
  %388 = vmatprep.subr.mxu0 0.0
  %389 = vmatpush1.msra.mxu0 %v368
  %390 = vmatprep.subr.mxu0 0.0
  %391 = vmatpush1.msra.mxu0 %v369
  %392 = vmatprep.subr.mxu0 0.0
  %393 = vmatpush1.msra.mxu0 %v370
  %394 = vmatprep.subr.mxu0 0.0
  %395 = vmatpush1.msra.mxu0 %v371
  %396 = vmatprep.subr.mxu0 0.0
  %397 = vmatpush1.msra.mxu0 0.0
  %398 = vmatprep.subr.mxu0 0.0
  %399 = vmatpush1.msra.mxu0 0.0
  %400 = vmatprep.subr.mxu0 0.0
  %401 = vmatpush1.msra.mxu0 0.0
  %402 = vmatprep.subr.mxu0 0.0
  %403 = vmatpush1.msra.mxu0 0.0
  %404 = vmatprep.subr.mxu0 0.0
  %405 = vmatpush1.msra.mxu0 0.0
  %406 = vmatprep.subr.mxu0 0.0
  %407 = vmatpush1.msra.mxu0 0.0
  %408 = vmatprep.subr.mxu0 0.0
  %409 = vmatpush1.msra.mxu0 0.0
  %410 = vmatprep.subr.mxu0 0.0
  %411 = vmatpush1.msra.mxu0 0.0
  %412 = vmatprep.subr.mxu0 0.0
  %413 = vmatpush1.msra.mxu0 0.0
  %414 = vmatprep.subr.mxu0 0.0
  %415 = vmatpush1.msra.mxu0 0.0
  %416 = vmatprep.subr.mxu0 0.0
  %417 = vmatpush1.msra.mxu0 0.0
  %418 = vmatprep.subr.mxu0 0.0
  %419 = vmatpush1.msra.mxu0 0.0
  %420 = vmatprep.subr.mxu0 0.0
  %421 = vmatpush1.msra.mxu0 0.0
  %422 = vmatprep.subr.mxu0 0.0
  %423 = vmatpush1.msra.mxu0 0.0
  %424 = vmatprep.subr.mxu0 0.0
  %425 = vmatpush1.msra.mxu0 0.0
  %426 = vmatprep.subr.mxu0 0.0
  %427 = vmatpush1.msra.mxu0 0.0
  %428 = vmatprep.subr.mxu0 0.0
  %429 = vmatpush1.msra.mxu0 0.0
  %430 = vmatprep.subr.mxu0 0.0
  %431 = vmatpush1.msra.mxu0 0.0
  %432 = vmatprep.subr.mxu0 0.0
  %433 = vmatpush1.msra.mxu0 0.0
  %434 = vmatprep.subr.mxu0 0.0
  %435 = vmatpush1.msra.mxu0 0.0
  %436 = vmatprep.subr.mxu0 0.0
  %437 = vmatpush1.msra.mxu0 0.0
  %438 = vmatprep.subr.mxu0 0.0
  %439 = vmatpush1.msra.mxu0 0.0
  %440 = vmatprep.subr.mxu0 0.0
  %441 = vmatpush1.msra.mxu0 0.0
  %442 = vmatprep.subr.mxu0 0.0
  %443 = vmatpush1.msra.mxu0 0.0
  %444 = vmatprep.mubr.f32.mxu0 0.0
  %445 = vmatmul.mubr.f32.gmra.mrb[0].mxu0 %v378
  %v446 = vpop.f32.mrb[0].mxu0
  %v447 = vadd.f32 %v376, %v446
  %v448 = vpop.f32.mrb[0].mxu0
  %449 = vdwg.mxu0
  %v450 = vld [vmem:[%s4] sm:$0xff]
  %v451 = vld [vmem:[%s4 + $0x8] sm:$0xff]
  %v452 = vld [vmem:[%s4 + $0x10] sm:$0xff]
  %v453 = vld [vmem:[%s4 + $0x18] sm:$0xff]
  %v454 = vld [vmem:[%s4 + $0x20] sm:$0xff]
  %v455 = vld [vmem:[%s4 + $0x28] sm:$0xff]
  %v456 = vld [vmem:[%s4 + $0x30] sm:$0xff]
  %v457 = vld [vmem:[%s4 + $0x38] sm:$0xff]
  %v458 = vld [vmem:[%s4 + $0x40] sm:$0xff]
  %v459 = vld [vmem:[%s4 + $0x48] sm:$0xff]
  %v460 = vld [vmem:[%s4 + $0x50] sm:$0xff]
  %v461 = vld [vmem:[%s4 + $0x58] sm:$0xff]
  %v462 = vld [vmem:[%s4 + $0x60] sm:$0xff]
  %v463 = vld [vmem:[%s4 + $0x68] sm:$0xff]
  %v464 = vld [vmem:[%s4 + $0x70] sm:$0xff]
  %v465 = vld [vmem:[%s4 + $0x78] sm:$0xff]
  %s466 = scalar_lea.vmem %s5, 3
  %v467 = vld [vmem:[%s466] ss:$4 sm:$0x3]
  %v469 = vlaneseq
  %v470 = vshrl.u32 %v469, 7
  %v471 = vsub.s32 0, %v470
  %v472 = vrot.slane %v467, %v471
  %v473 = vlaneseq
  %v474 = vshrl.u32 %v473, 7
  %v475 = vsub.s32 1, %v474
  %v476 = vrot.slane %v467, %v475
  %v480 = vsel %vm182, %v447, 0
  %482 = vmatprep.subr.mxu0 %v451
  %483 = vmatpush1.msra.mxu0 %v450
  %484 = vmatprep.subr.mxu0 %v453
  %485 = vmatpush1.msra.mxu0 %v452
  %486 = vmatprep.subr.mxu0 %v455
  %487 = vmatpush1.msra.mxu0 %v454
  %488 = vmatprep.subr.mxu0 %v457
  %489 = vmatpush1.msra.mxu0 %v456
  %490 = vmatprep.subr.mxu0 %v459
  %491 = vmatpush1.msra.mxu0 %v458
  %492 = vmatprep.subr.mxu0 %v461
  %493 = vmatpush1.msra.mxu0 %v460
  %494 = vmatprep.subr.mxu0 %v463
  %495 = vmatpush1.msra.mxu0 %v462
  %496 = vmatprep.subr.mxu0 %v465
  %497 = vmatpush1.msra.mxu0 %v464
  %498 = vmatprep.subr.mxu0 0.0
  %499 = vmatpush1.msra.mxu0 0.0
  %500 = vmatprep.subr.mxu0 0.0
  %501 = vmatpush1.msra.mxu0 0.0
  %502 = vmatprep.subr.mxu0 0.0
  %503 = vmatpush1.msra.mxu0 0.0
  %504 = vmatprep.subr.mxu0 0.0
  %505 = vmatpush1.msra.mxu0 0.0
  %506 = vmatprep.subr.mxu0 0.0
  %507 = vmatpush1.msra.mxu0 0.0
  %508 = vmatprep.subr.mxu0 0.0
  %509 = vmatpush1.msra.mxu0 0.0
  %510 = vmatprep.subr.mxu0 0.0
  %511 = vmatpush1.msra.mxu0 0.0
  %512 = vmatprep.subr.mxu0 0.0
  %513 = vmatpush1.msra.mxu0 0.0
  %514 = vmatprep.subr.mxu0 0.0
  %515 = vmatpush1.msra.mxu0 0.0
  %516 = vmatprep.subr.mxu0 0.0
  %517 = vmatpush1.msra.mxu0 0.0
  %518 = vmatprep.subr.mxu0 0.0
  %519 = vmatpush1.msra.mxu0 0.0
  %520 = vmatprep.subr.mxu0 0.0
  %521 = vmatpush1.msra.mxu0 0.0
  %522 = vmatprep.subr.mxu0 0.0
  %523 = vmatpush1.msra.mxu0 0.0
  %524 = vmatprep.subr.mxu0 0.0
  %525 = vmatpush1.msra.mxu0 0.0
  %526 = vmatprep.subr.mxu0 0.0
  %527 = vmatpush1.msra.mxu0 0.0
  %528 = vmatprep.subr.mxu0 0.0
  %529 = vmatpush1.msra.mxu0 0.0
  %530 = vmatprep.subr.mxu0 0.0
  %531 = vmatpush1.msra.mxu0 0.0
  %532 = vmatprep.subr.mxu0 0.0
  %533 = vmatpush1.msra.mxu0 0.0
  %534 = vmatprep.subr.mxu0 0.0
  %535 = vmatpush1.msra.mxu0 0.0
  %536 = vmatprep.subr.mxu0 0.0
  %537 = vmatpush1.msra.mxu0 0.0
  %538 = vmatprep.subr.mxu0 0.0
  %539 = vmatpush1.msra.mxu0 0.0
  %540 = vmatprep.subr.mxu0 0.0
  %541 = vmatpush1.msra.mxu0 0.0
  %542 = vmatprep.subr.mxu0 0.0
  %543 = vmatpush1.msra.mxu0 0.0
  %544 = vmatprep.subr.mxu0 0.0
  %545 = vmatpush1.msra.mxu0 0.0
  %546 = vmatprep.mubr.f32.mxu0 0.0
  %547 = vmatmul.mubr.f32.gmra.mrb[0].mxu0 %v480
  %v548 = vpop.f32.mrb[0].mxu0
  %v549 = vadd.f32 %v472, %v548
  %v550 = vpop.f32.mrb[0].mxu0
  %v551 = vadd.f32 %v476, %v550
  %552 = vdwg.mxu0
  %553 = vmax.xlane.f32.xlu0 %v549
  %v554 = vpop.xlane.xlu0 %553
  %v555 = vsub.f32 %v549, %v554
  %v556 = vmul.f32 %v555, 1.442695
  %v557 = vpow.pop %v556
  %558 = vadd.xlane.f32.xlu0 %v557
  %v559 = vpop.xlane.xlu0 %558
  %v560 = vrcp.pop %v559
  %v561 = vmul.f32 %v557, %v560
  %vm562 = vcmp.eq.s32.totalorder %v347, 7
  %v563 = vstv %s358
  %v564 = vsel %vm562, %v563, %v561
  %565 = vst [vmem:[%s12] sm:$0xff] %v564
  %v566 = vlaneseq
  %v567 = vand.u32 %v566, 127
  %v568 = vld [vmem:[%s6] sm:$0xff]
  %v569 = vld [vmem:[%s6 + $0x8] sm:$0xff]
  %v570 = vld [vmem:[%s6 + $0x10] sm:$0xff]
  %v571 = vld [vmem:[%s6 + $0x18] sm:$0xff]
  %v572 = vld [vmem:[%s6 + $0x20] sm:$0xff]
  %v573 = vld [vmem:[%s6 + $0x28] sm:$0xff]
  %v574 = vld [vmem:[%s6 + $0x30] sm:$0xff]
  %v575 = vld [vmem:[%s6 + $0x38] sm:$0xff]
  %v576 = vld [vmem:[%s6 + $0x40] sm:$0xff]
  %v577 = vld [vmem:[%s6 + $0x48] sm:$0xff]
  %v578 = vld [vmem:[%s6 + $0x50] sm:$0xff]
  %v579 = vld [vmem:[%s6 + $0x58] sm:$0xff]
  %v580 = vld [vmem:[%s6 + $0x60] sm:$0xff]
  %v581 = vld [vmem:[%s6 + $0x68] sm:$0xff]
  %v582 = vld [vmem:[%s6 + $0x70] sm:$0xff]
  %v583 = vld [vmem:[%s6 + $0x78] sm:$0xff]
  %v584 = vld [vmem:[%s6 + $0x80] sm:$0xff]
  %v585 = vld [vmem:[%s6 + $0x88] sm:$0xff]
  %v586 = vld [vmem:[%s6 + $0x90] sm:$0xff]
  %v587 = vld [vmem:[%s6 + $0x98] sm:$0xff]
  %v588 = vld [vmem:[%s6 + $0xa0] sm:$0xff]
  %v589 = vld [vmem:[%s6 + $0xa8] sm:$0xff]
  %v590 = vld [vmem:[%s6 + $0xb0] sm:$0xff]
  %v591 = vld [vmem:[%s6 + $0xb8] sm:$0xff]
  %v592 = vld [vmem:[%s6 + $0xc0] sm:$0xff]
  %v593 = vld [vmem:[%s6 + $0xc8] sm:$0xff]
  %v594 = vld [vmem:[%s6 + $0xd0] sm:$0xff]
  %v595 = vld [vmem:[%s6 + $0xd8] sm:$0xff]
  %v596 = vld [vmem:[%s6 + $0xe0] sm:$0xff]
  %v597 = vld [vmem:[%s6 + $0xe8] sm:$0xff]
  %v598 = vld [vmem:[%s6 + $0xf0] sm:$0xff]
  %v599 = vld [vmem:[%s6 + $0xf8] sm:$0xff]
  %v600 = vld [vmem:[%s6 + $0x100] sm:$0xff]
  %v601 = vld [vmem:[%s6 + $0x108] sm:$0xff]
  %v602 = vld [vmem:[%s6 + $0x110] sm:$0xff]
  %v603 = vld [vmem:[%s6 + $0x118] sm:$0xff]
  %v604 = vld [vmem:[%s6 + $0x120] sm:$0xff]
  %v605 = vld [vmem:[%s6 + $0x128] sm:$0xff]
  %v606 = vld [vmem:[%s6 + $0x130] sm:$0xff]
  %v607 = vld [vmem:[%s6 + $0x138] sm:$0xff]
  %v608 = vld [vmem:[%s6 + $0x140] sm:$0xff]
  %v609 = vld [vmem:[%s6 + $0x148] sm:$0xff]
  %v610 = vld [vmem:[%s6 + $0x150] sm:$0xff]
  %v611 = vld [vmem:[%s6 + $0x158] sm:$0xff]
  %v612 = vld [vmem:[%s6 + $0x160] sm:$0xff]
  %v613 = vld [vmem:[%s6 + $0x168] sm:$0xff]
  %v614 = vld [vmem:[%s6 + $0x170] sm:$0xff]
  %v615 = vld [vmem:[%s6 + $0x178] sm:$0xff]
  %v616 = vld [vmem:[%s6 + $0x180] sm:$0xff]
  %v617 = vld [vmem:[%s6 + $0x188] sm:$0xff]
  %v618 = vld [vmem:[%s6 + $0x190] sm:$0xff]
  %v619 = vld [vmem:[%s6 + $0x198] sm:$0xff]
  %v620 = vld [vmem:[%s6 + $0x1a0] sm:$0xff]
  %v621 = vld [vmem:[%s6 + $0x1a8] sm:$0xff]
  %v622 = vld [vmem:[%s6 + $0x1b0] sm:$0xff]
  %v623 = vld [vmem:[%s6 + $0x1b8] sm:$0xff]
  %v624 = vld [vmem:[%s6 + $0x1c0] sm:$0xff]
  %v625 = vld [vmem:[%s6 + $0x1c8] sm:$0xff]
  %v626 = vld [vmem:[%s6 + $0x1d0] sm:$0xff]
  %v627 = vld [vmem:[%s6 + $0x1d8] sm:$0xff]
  %v628 = vld [vmem:[%s6 + $0x1e0] sm:$0xff]
  %v629 = vld [vmem:[%s6 + $0x1e8] sm:$0xff]
  %v630 = vld [vmem:[%s6 + $0x1f0] sm:$0xff]
  %v631 = vld [vmem:[%s6 + $0x1f8] sm:$0xff]
  %v632 = vld [vmem:[%s7] sm:$0xf]
  %v634 = vlaneseq
  %v635 = vshrl.u32 %v634, 7
  %v636 = vsub.s32 0, %v635
  %v637 = vrot.slane %v632, %v636
  %v638 = vlaneseq
  %v639 = vshrl.u32 %v638, 7
  %v640 = vsub.s32 1, %v639
  %v641 = vrot.slane %v632, %v640
  %v642 = vlaneseq
  %v643 = vshrl.u32 %v642, 7
  %v644 = vsub.s32 2, %v643
  %v645 = vrot.slane %v632, %v644
  %v646 = vlaneseq
  %v647 = vshrl.u32 %v646, 7
  %v648 = vsub.s32 3, %v647
  %v649 = vrot.slane %v632, %v648
  %v654 = vld [vmem:[%s8] sm:$0xff]
  %v655 = vld [vmem:[%s8 + $0x8] sm:$0xff]
  %v656 = vld [vmem:[%s8 + $0x10] sm:$0xff]
  %v657 = vld [vmem:[%s8 + $0x18] sm:$0xff]
  %v658 = vld [vmem:[%s9] sm:$0x1]
  %v660 = vlaneseq
  %v661 = vshrl.u32 %v660, 7
  %v662 = vsub.s32 0, %v661
  %v663 = vrot.slane %v658, %v662
  %vm665 = vcmp.eq.s32.totalorder %v567, 33
  %v666 = vsel %vm665, 1, 0
  %v667 = vcvt.s32.f32 %v666
  %v668 = vadd.f32 %v551, %v667
  %669 = vmatprep.subr.mxu0 %v569
  %670 = vmatpush1.msra.mxu0 %v568
  %671 = vmatprep.subr.mxu0 %v573
  %672 = vmatpush1.msra.mxu0 %v572
  %673 = vmatprep.subr.mxu0 %v577
  %674 = vmatpush1.msra.mxu0 %v576
  %675 = vmatprep.subr.mxu0 %v581
  %676 = vmatpush1.msra.mxu0 %v580
  %677 = vmatprep.subr.mxu0 %v585
  %678 = vmatpush1.msra.mxu0 %v584
  %679 = vmatprep.subr.mxu0 %v589
  %680 = vmatpush1.msra.mxu0 %v588
  %681 = vmatprep.subr.mxu0 %v593
  %682 = vmatpush1.msra.mxu0 %v592
  %683 = vmatprep.subr.mxu0 %v597
  %684 = vmatpush1.msra.mxu0 %v596
  %685 = vmatprep.subr.mxu0 %v601
  %686 = vmatpush1.msra.mxu0 %v600
  %687 = vmatprep.subr.mxu0 %v605
  %688 = vmatpush1.msra.mxu0 %v604
  %689 = vmatprep.subr.mxu0 %v609
  %690 = vmatpush1.msra.mxu0 %v608
  %691 = vmatprep.subr.mxu0 %v613
  %692 = vmatpush1.msra.mxu0 %v612
  %693 = vmatprep.subr.mxu0 %v617
  %694 = vmatpush1.msra.mxu0 %v616
  %695 = vmatprep.subr.mxu0 %v621
  %696 = vmatpush1.msra.mxu0 %v620
  %697 = vmatprep.subr.mxu0 %v625
  %698 = vmatpush1.msra.mxu0 %v624
  %699 = vmatprep.subr.mxu0 %v629
  %700 = vmatpush1.msra.mxu0 %v628
  %701 = vmatprep.subr.mxu0 0.0
  %702 = vmatpush1.msra.mxu0 0.0
  %703 = vmatprep.subr.mxu0 0.0
  %704 = vmatpush1.msra.mxu0 0.0
  %705 = vmatprep.subr.mxu0 0.0
  %706 = vmatpush1.msra.mxu0 0.0
  %707 = vmatprep.subr.mxu0 0.0
  %708 = vmatpush1.msra.mxu0 0.0
  %709 = vmatprep.subr.mxu0 0.0
  %710 = vmatpush1.msra.mxu0 0.0
  %711 = vmatprep.subr.mxu0 0.0
  %712 = vmatpush1.msra.mxu0 0.0
  %713 = vmatprep.subr.mxu0 0.0
  %714 = vmatpush1.msra.mxu0 0.0
  %715 = vmatprep.subr.mxu0 0.0
  %716 = vmatpush1.msra.mxu0 0.0
  %717 = vmatprep.subr.mxu0 0.0
  %718 = vmatpush1.msra.mxu0 0.0
  %719 = vmatprep.subr.mxu0 0.0
  %720 = vmatpush1.msra.mxu0 0.0
  %721 = vmatprep.subr.mxu0 0.0
  %722 = vmatpush1.msra.mxu0 0.0
  %723 = vmatprep.subr.mxu0 0.0
  %724 = vmatpush1.msra.mxu0 0.0
  %725 = vmatprep.subr.mxu0 0.0
  %726 = vmatpush1.msra.mxu0 0.0
  %727 = vmatprep.subr.mxu0 0.0
  %728 = vmatpush1.msra.mxu0 0.0
  %729 = vmatprep.subr.mxu0 0.0
  %730 = vmatpush1.msra.mxu0 0.0
  %731 = vmatprep.subr.mxu0 0.0
  %732 = vmatpush1.msra.mxu0 0.0
  %733 = vmatprep.mubr.f32.mxu0 0.0
  %734 = vmatmul.mubr.f32.gmra.mrb[0].mxu0 %v668
  %v735 = vpop.f32.mrb[0].mxu0
  %v736 = vadd.f32 %v637, %v735
  %v737 = vpop.f32.mrb[0].mxu0
  %v738 = vadd.f32 %v641, %v737
  %739 = vdwg.mxu0
  %740 = vmatprep.subr.mxu0 %v571
  %741 = vmatpush1.msra.mxu0 %v570
  %742 = vmatprep.subr.mxu0 %v575
  %743 = vmatpush1.msra.mxu0 %v574
  %744 = vmatprep.subr.mxu0 %v579
  %745 = vmatpush1.msra.mxu0 %v578
  %746 = vmatprep.subr.mxu0 %v583
  %747 = vmatpush1.msra.mxu0 %v582
  %748 = vmatprep.subr.mxu0 %v587
  %749 = vmatpush1.msra.mxu0 %v586
  %750 = vmatprep.subr.mxu0 %v591
  %751 = vmatpush1.msra.mxu0 %v590
  %752 = vmatprep.subr.mxu0 %v595
  %753 = vmatpush1.msra.mxu0 %v594
  %754 = vmatprep.subr.mxu0 %v599
  %755 = vmatpush1.msra.mxu0 %v598
  %756 = vmatprep.subr.mxu0 %v603
  %757 = vmatpush1.msra.mxu0 %v602
  %758 = vmatprep.subr.mxu0 %v607
  %759 = vmatpush1.msra.mxu0 %v606
  %760 = vmatprep.subr.mxu0 %v611
  %761 = vmatpush1.msra.mxu0 %v610
  %762 = vmatprep.subr.mxu0 %v615
  %763 = vmatpush1.msra.mxu0 %v614
  %764 = vmatprep.subr.mxu0 %v619
  %765 = vmatpush1.msra.mxu0 %v618
  %766 = vmatprep.subr.mxu0 %v623
  %767 = vmatpush1.msra.mxu0 %v622
  %768 = vmatprep.subr.mxu0 %v627
  %769 = vmatpush1.msra.mxu0 %v626
  %770 = vmatprep.subr.mxu0 %v631
  %771 = vmatpush1.msra.mxu0 %v630
  %772 = vmatprep.subr.mxu0 0.0
  %773 = vmatpush1.msra.mxu0 0.0
  %774 = vmatprep.subr.mxu0 0.0
  %775 = vmatpush1.msra.mxu0 0.0
  %776 = vmatprep.subr.mxu0 0.0
  %777 = vmatpush1.msra.mxu0 0.0
  %778 = vmatprep.subr.mxu0 0.0
  %779 = vmatpush1.msra.mxu0 0.0
  %780 = vmatprep.subr.mxu0 0.0
  %781 = vmatpush1.msra.mxu0 0.0
  %782 = vmatprep.subr.mxu0 0.0
  %783 = vmatpush1.msra.mxu0 0.0
  %784 = vmatprep.subr.mxu0 0.0
  %785 = vmatpush1.msra.mxu0 0.0
  %786 = vmatprep.subr.mxu0 0.0
  %787 = vmatpush1.msra.mxu0 0.0
  %788 = vmatprep.subr.mxu0 0.0
  %789 = vmatpush1.msra.mxu0 0.0
  %790 = vmatprep.subr.mxu0 0.0
  %791 = vmatpush1.msra.mxu0 0.0
  %792 = vmatprep.subr.mxu0 0.0
  %793 = vmatpush1.msra.mxu0 0.0
  %794 = vmatprep.subr.mxu0 0.0
  %795 = vmatpush1.msra.mxu0 0.0
  %796 = vmatprep.subr.mxu0 0.0
  %797 = vmatpush1.msra.mxu0 0.0
  %798 = vmatprep.subr.mxu0 0.0
  %799 = vmatpush1.msra.mxu0 0.0
  %800 = vmatprep.subr.mxu0 0.0
  %801 = vmatpush1.msra.mxu0 0.0
  %802 = vmatprep.subr.mxu0 0.0
  %803 = vmatpush1.msra.mxu0 0.0
  %804 = vmatprep.mubr.f32.mxu0 0.0
  %805 = vmatmul.mubr.f32.gmra.mrb[0].mxu0 %v668
  %v806 = vpop.f32.mrb[0].mxu0
  %v807 = vadd.f32 %v645, %v806
  %v808 = vpop.f32.mrb[0].mxu0
  %v809 = vadd.f32 %v649, %v808
  %810 = vdwg.mxu0
  %v811 = vxor.u32 %v736, 2147483648
  %v812 = vmul.f32 %v811, 1.442695
  %v813 = vpow.pop %v812
  %v814 = vadd.f32 %v813, 1.0
  %v815 = vrcp.pop %v814
  %v816 = vmul.f32 1.0, %v815
  %v817 = vxor.u32 %v738, 2147483648
  %v818 = vmul.f32 %v817, 1.442695
  %v819 = vpow.pop %v818
  %v820 = vadd.f32 %v819, 1.0
  %v821 = vrcp.pop %v820
  %v822 = vmul.f32 1.0, %v821
  %v823 = vmul.f32 %v816, %v809
  %v824 = vadd.f32 %v807, %v823
  %v825 = vtanh.pop %v824
  %v826 = vsub.f32 1.0, %v822
  %v827 = vmul.f32 %v826, %v825
  %v828 = vmul.f32 %v822, %v551
  %v829 = vadd.f32 %v827, %v828
  %v831 = vsel %vm52, %v829, 0
  %833 = vmatprep.subr.mxu0 0.0
  %834 = vmatpush1.msra.mxu0 %v654
  %835 = vmatprep.subr.mxu0 0.0
  %836 = vmatpush1.msra.mxu0 %v655
  %837 = vmatprep.subr.mxu0 0.0
  %838 = vmatpush1.msra.mxu0 %v656
  %839 = vmatprep.subr.mxu0 0.0
  %840 = vmatpush1.msra.mxu0 %v657
  %841 = vmatprep.subr.mxu0 0.0
  %842 = vmatpush1.msra.mxu0 0.0
  %843 = vmatprep.subr.mxu0 0.0
  %844 = vmatpush1.msra.mxu0 0.0
  %845 = vmatprep.subr.mxu0 0.0
  %846 = vmatpush1.msra.mxu0 0.0
  %847 = vmatprep.subr.mxu0 0.0
  %848 = vmatpush1.msra.mxu0 0.0
  %849 = vmatprep.subr.mxu0 0.0
  %850 = vmatpush1.msra.mxu0 0.0
  %851 = vmatprep.subr.mxu0 0.0
  %852 = vmatpush1.msra.mxu0 0.0
  %853 = vmatprep.subr.mxu0 0.0
  %854 = vmatpush1.msra.mxu0 0.0
  %855 = vmatprep.subr.mxu0 0.0
  %856 = vmatpush1.msra.mxu0 0.0
  %857 = vmatprep.subr.mxu0 0.0
  %858 = vmatpush1.msra.mxu0 0.0
  %859 = vmatprep.subr.mxu0 0.0
  %860 = vmatpush1.msra.mxu0 0.0
  %861 = vmatprep.subr.mxu0 0.0
  %862 = vmatpush1.msra.mxu0 0.0
  %863 = vmatprep.subr.mxu0 0.0
  %864 = vmatpush1.msra.mxu0 0.0
  %865 = vmatprep.subr.mxu0 0.0
  %866 = vmatpush1.msra.mxu0 0.0
  %867 = vmatprep.subr.mxu0 0.0
  %868 = vmatpush1.msra.mxu0 0.0
  %869 = vmatprep.subr.mxu0 0.0
  %870 = vmatpush1.msra.mxu0 0.0
  %871 = vmatprep.subr.mxu0 0.0
  %872 = vmatpush1.msra.mxu0 0.0
  %873 = vmatprep.subr.mxu0 0.0
  %874 = vmatpush1.msra.mxu0 0.0
  %875 = vmatprep.subr.mxu0 0.0
  %876 = vmatpush1.msra.mxu0 0.0
  %877 = vmatprep.subr.mxu0 0.0
  %878 = vmatpush1.msra.mxu0 0.0
  %879 = vmatprep.subr.mxu0 0.0
  %880 = vmatpush1.msra.mxu0 0.0
  %881 = vmatprep.subr.mxu0 0.0
  %882 = vmatpush1.msra.mxu0 0.0
  %883 = vmatprep.subr.mxu0 0.0
  %884 = vmatpush1.msra.mxu0 0.0
  %885 = vmatprep.subr.mxu0 0.0
  %886 = vmatpush1.msra.mxu0 0.0
  %887 = vmatprep.subr.mxu0 0.0
  %888 = vmatpush1.msra.mxu0 0.0
  %889 = vmatprep.subr.mxu0 0.0
  %890 = vmatpush1.msra.mxu0 0.0
  %891 = vmatprep.subr.mxu0 0.0
  %892 = vmatpush1.msra.mxu0 0.0
  %893 = vmatprep.subr.mxu0 0.0
  %894 = vmatpush1.msra.mxu0 0.0
  %895 = vmatprep.subr.mxu0 0.0
  %896 = vmatpush1.msra.mxu0 0.0
  %897 = vmatprep.mubr.f32.mxu0 0.0
  %898 = vmatmul.mubr.f32.gmra.mrb[0].mxu0 %v831
  %v899 = vpop.f32.mrb[0].mxu0
  %v900 = vadd.f32 %v663, %v899
  %v901 = vpop.f32.mrb[0].mxu0
  %902 = vdwg.mxu0
  %903 = vmax.xlane.f32.xlu0 %v900
  %v904 = vpop.xlane.xlu0 %903
  %v905 = vsub.f32 %v900, %v904
  %v906 = vmul.f32 %v905, 1.442695
  %v907 = vpow.pop %v906
  %908 = vadd.xlane.f32.xlu0 %v907
  %v909 = vpop.xlane.xlu0 %908
  %v910 = vrcp.pop %v909
  %v911 = vmul.f32 %v907, %v910
  %912 = vst [vmem:[%s11] sm:$0xff] %v911
  %vm913 = vcmp.ge.f32.partialorder %v900, %v904
  %v914 = vsel %vm913, %v567, 128
  %v915 = vand.u32 %v914, 65535
  %v916 = vshra.s32 %v914, 16
  %v917 = vcvt.s32.f32 %v915
  %v918 = vcvt.s32.f32 %v916
  %919 = vmin.xlane.f32.xlu0 %v918
  %v920 = vpop.xlane.xlu0 %919
  %vm921 = vcmp.eq.f32.partialorder %v918, %v920
  %v922 = vsel %vm921, %v917, inf
  %923 = vmin.xlane.f32.xlu0 %v922
  %v924 = vpop.xlane.xlu0 %923
  %v925 = vcvt.f32.s32 %v924
  %v926 = vcvt.f32.s32 %v920
  %v927 = vshll.u32 %v926, 16
  %v928 = vadd.s32 %v927, %v925
  %v929 = vadd.s32 %v928, 32
  %vm930 = vcmp.eq.s32.totalorder %v567, %v929
  %v931 = vsel %vm930, 1, 0
  %v932 = vcvt.s32.f32 %v931
  %v933 = vadd.f32 %v829, %v932
  %934 = vmatprep.subr.mxu0 %v569
  %935 = vmatpush1.msra.mxu0 %v568
  %936 = vmatprep.subr.mxu0 %v573
  %937 = vmatpush1.msra.mxu0 %v572
  %938 = vmatprep.subr.mxu0 %v577
  %939 = vmatpush1.msra.mxu0 %v576
  %940 = vmatprep.subr.mxu0 %v581
  %941 = vmatpush1.msra.mxu0 %v580
  %942 = vmatprep.subr.mxu0 %v585
  %943 = vmatpush1.msra.mxu0 %v584
  %944 = vmatprep.subr.mxu0 %v589
  %945 = vmatpush1.msra.mxu0 %v588
  %946 = vmatprep.subr.mxu0 %v593
  %947 = vmatpush1.msra.mxu0 %v592
  %948 = vmatprep.subr.mxu0 %v597
  %949 = vmatpush1.msra.mxu0 %v596
  %950 = vmatprep.subr.mxu0 %v601
  %951 = vmatpush1.msra.mxu0 %v600
  %952 = vmatprep.subr.mxu0 %v605
  %953 = vmatpush1.msra.mxu0 %v604
  %954 = vmatprep.subr.mxu0 %v609
  %955 = vmatpush1.msra.mxu0 %v608
  %956 = vmatprep.subr.mxu0 %v613
  %957 = vmatpush1.msra.mxu0 %v612
  %958 = vmatprep.subr.mxu0 %v617
  %959 = vmatpush1.msra.mxu0 %v616
  %960 = vmatprep.subr.mxu0 %v621
  %961 = vmatpush1.msra.mxu0 %v620
  %962 = vmatprep.subr.mxu0 %v625
  %963 = vmatpush1.msra.mxu0 %v624
  %964 = vmatprep.subr.mxu0 %v629
  %965 = vmatpush1.msra.mxu0 %v628
  %966 = vmatprep.subr.mxu0 0.0
  %967 = vmatpush1.msra.mxu0 0.0
  %968 = vmatprep.subr.mxu0 0.0
  %969 = vmatpush1.msra.mxu0 0.0
  %970 = vmatprep.subr.mxu0 0.0
  %971 = vmatpush1.msra.mxu0 0.0
  %972 = vmatprep.subr.mxu0 0.0
  %973 = vmatpush1.msra.mxu0 0.0
  %974 = vmatprep.subr.mxu0 0.0
  %975 = vmatpush1.msra.mxu0 0.0
  %976 = vmatprep.subr.mxu0 0.0
  %977 = vmatpush1.msra.mxu0 0.0
  %978 = vmatprep.subr.mxu0 0.0
  %979 = vmatpush1.msra.mxu0 0.0
  %980 = vmatprep.subr.mxu0 0.0
  %981 = vmatpush1.msra.mxu0 0.0
  %982 = vmatprep.subr.mxu0 0.0
  %983 = vmatpush1.msra.mxu0 0.0
  %984 = vmatprep.subr.mxu0 0.0
  %985 = vmatpush1.msra.mxu0 0.0
  %986 = vmatprep.subr.mxu0 0.0
  %987 = vmatpush1.msra.mxu0 0.0
  %988 = vmatprep.subr.mxu0 0.0
  %989 = vmatpush1.msra.mxu0 0.0
  %990 = vmatprep.subr.mxu0 0.0
  %991 = vmatpush1.msra.mxu0 0.0
  %992 = vmatprep.subr.mxu0 0.0
  %993 = vmatpush1.msra.mxu0 0.0
  %994 = vmatprep.subr.mxu0 0.0
  %995 = vmatpush1.msra.mxu0 0.0
  %996 = vmatprep.subr.mxu0 0.0
  %997 = vmatpush1.msra.mxu0 0.0
  %998 = vmatprep.mubr.f32.mxu0 0.0
  %999 = vmatmul.mubr.f32.gmra.mrb[0].mxu0 %v933
  %v1000 = vpop.f32.mrb[0].mxu0
  %v1001 = vadd.f32 %v637, %v1000
  %v1002 = vpop.f32.mrb[0].mxu0
  %v1003 = vadd.f32 %v641, %v1002
  %1004 = vdwg.mxu0
  %1005 = vmatprep.subr.mxu0 %v571
  %1006 = vmatpush1.msra.mxu0 %v570
  %1007 = vmatprep.subr.mxu0 %v575
  %1008 = vmatpush1.msra.mxu0 %v574
  %1009 = vmatprep.subr.mxu0 %v579
  %1010 = vmatpush1.msra.mxu0 %v578
  %1011 = vmatprep.subr.mxu0 %v583
  %1012 = vmatpush1.msra.mxu0 %v582
  %1013 = vmatprep.subr.mxu0 %v587
  %1014 = vmatpush1.msra.mxu0 %v586
  %1015 = vmatprep.subr.mxu0 %v591
  %1016 = vmatpush1.msra.mxu0 %v590
  %1017 = vmatprep.subr.mxu0 %v595
  %1018 = vmatpush1.msra.mxu0 %v594
  %1019 = vmatprep.subr.mxu0 %v599
  %1020 = vmatpush1.msra.mxu0 %v598
  %1021 = vmatprep.subr.mxu0 %v603
  %1022 = vmatpush1.msra.mxu0 %v602
  %1023 = vmatprep.subr.mxu0 %v607
  %1024 = vmatpush1.msra.mxu0 %v606
  %1025 = vmatprep.subr.mxu0 %v611
  %1026 = vmatpush1.msra.mxu0 %v610
  %1027 = vmatprep.subr.mxu0 %v615
  %1028 = vmatpush1.msra.mxu0 %v614
  %1029 = vmatprep.subr.mxu0 %v619
  %1030 = vmatpush1.msra.mxu0 %v618
  %1031 = vmatprep.subr.mxu0 %v623
  %1032 = vmatpush1.msra.mxu0 %v622
  %1033 = vmatprep.subr.mxu0 %v627
  %1034 = vmatpush1.msra.mxu0 %v626
  %1035 = vmatprep.subr.mxu0 %v631
  %1036 = vmatpush1.msra.mxu0 %v630
  %1037 = vmatprep.subr.mxu0 0.0
  %1038 = vmatpush1.msra.mxu0 0.0
  %1039 = vmatprep.subr.mxu0 0.0
  %1040 = vmatpush1.msra.mxu0 0.0
  %1041 = vmatprep.subr.mxu0 0.0
  %1042 = vmatpush1.msra.mxu0 0.0
  %1043 = vmatprep.subr.mxu0 0.0
  %1044 = vmatpush1.msra.mxu0 0.0
  %1045 = vmatprep.subr.mxu0 0.0
  %1046 = vmatpush1.msra.mxu0 0.0
  %1047 = vmatprep.subr.mxu0 0.0
  %1048 = vmatpush1.msra.mxu0 0.0
  %1049 = vmatprep.subr.mxu0 0.0
  %1050 = vmatpush1.msra.mxu0 0.0
  %1051 = vmatprep.subr.mxu0 0.0
  %1052 = vmatpush1.msra.mxu0 0.0
  %1053 = vmatprep.subr.mxu0 0.0
  %1054 = vmatpush1.msra.mxu0 0.0
  %1055 = vmatprep.subr.mxu0 0.0
  %1056 = vmatpush1.msra.mxu0 0.0
  %1057 = vmatprep.subr.mxu0 0.0
  %1058 = vmatpush1.msra.mxu0 0.0
  %1059 = vmatprep.subr.mxu0 0.0
  %1060 = vmatpush1.msra.mxu0 0.0
  %1061 = vmatprep.subr.mxu0 0.0
  %1062 = vmatpush1.msra.mxu0 0.0
  %1063 = vmatprep.subr.mxu0 0.0
  %1064 = vmatpush1.msra.mxu0 0.0
  %1065 = vmatprep.subr.mxu0 0.0
  %1066 = vmatpush1.msra.mxu0 0.0
  %1067 = vmatprep.subr.mxu0 0.0
  %1068 = vmatpush1.msra.mxu0 0.0
  %1069 = vmatprep.mubr.f32.mxu0 0.0
  %1070 = vmatmul.mubr.f32.gmra.mrb[0].mxu0 %v933
  %v1071 = vpop.f32.mrb[0].mxu0
  %v1072 = vadd.f32 %v645, %v1071
  %v1073 = vpop.f32.mrb[0].mxu0
  %v1074 = vadd.f32 %v649, %v1073
  %1075 = vdwg.mxu0
  %v1076 = vxor.u32 %v1001, 2147483648
  %v1077 = vmul.f32 %v1076, 1.442695
  %v1078 = vpow.pop %v1077
  %v1079 = vadd.f32 %v1078, 1.0
  %v1080 = vrcp.pop %v1079
  %v1081 = vmul.f32 1.0, %v1080
  %v1082 = vxor.u32 %v1003, 2147483648
  %v1083 = vmul.f32 %v1082, 1.442695
  %v1084 = vpow.pop %v1083
  %v1085 = vadd.f32 %v1084, 1.0
  %v1086 = vrcp.pop %v1085
  %v1087 = vmul.f32 1.0, %v1086
  %v1088 = vmul.f32 %v1081, %v1074
  %v1089 = vadd.f32 %v1072, %v1088
  %v1090 = vtanh.pop %v1089
  %v1091 = vsub.f32 1.0, %v1087
  %v1092 = vmul.f32 %v1091, %v1090
  %v1093 = vmul.f32 %v1087, %v829
  %v1094 = vadd.f32 %v1092, %v1093
  %v1096 = vsel %vm52, %v1094, 0
  %1098 = vmatprep.subr.mxu0 0.0
  %1099 = vmatpush1.msra.mxu0 %v654
  %1100 = vmatprep.subr.mxu0 0.0
  %1101 = vmatpush1.msra.mxu0 %v655
  %1102 = vmatprep.subr.mxu0 0.0
  %1103 = vmatpush1.msra.mxu0 %v656
  %1104 = vmatprep.subr.mxu0 0.0
  %1105 = vmatpush1.msra.mxu0 %v657
  %1106 = vmatprep.subr.mxu0 0.0
  %1107 = vmatpush1.msra.mxu0 0.0
  %1108 = vmatprep.subr.mxu0 0.0
  %1109 = vmatpush1.msra.mxu0 0.0
  %1110 = vmatprep.subr.mxu0 0.0
  %1111 = vmatpush1.msra.mxu0 0.0
  %1112 = vmatprep.subr.mxu0 0.0
  %1113 = vmatpush1.msra.mxu0 0.0
  %1114 = vmatprep.subr.mxu0 0.0
  %1115 = vmatpush1.msra.mxu0 0.0
  %1116 = vmatprep.subr.mxu0 0.0
  %1117 = vmatpush1.msra.mxu0 0.0
  %1118 = vmatprep.subr.mxu0 0.0
  %1119 = vmatpush1.msra.mxu0 0.0
  %1120 = vmatprep.subr.mxu0 0.0
  %1121 = vmatpush1.msra.mxu0 0.0
  %1122 = vmatprep.subr.mxu0 0.0
  %1123 = vmatpush1.msra.mxu0 0.0
  %1124 = vmatprep.subr.mxu0 0.0
  %1125 = vmatpush1.msra.mxu0 0.0
  %1126 = vmatprep.subr.mxu0 0.0
  %1127 = vmatpush1.msra.mxu0 0.0
  %1128 = vmatprep.subr.mxu0 0.0
  %1129 = vmatpush1.msra.mxu0 0.0
  %1130 = vmatprep.subr.mxu0 0.0
  %1131 = vmatpush1.msra.mxu0 0.0
  %1132 = vmatprep.subr.mxu0 0.0
  %1133 = vmatpush1.msra.mxu0 0.0
  %1134 = vmatprep.subr.mxu0 0.0
  %1135 = vmatpush1.msra.mxu0 0.0
  %1136 = vmatprep.subr.mxu0 0.0
  %1137 = vmatpush1.msra.mxu0 0.0
  %1138 = vmatprep.subr.mxu0 0.0
  %1139 = vmatpush1.msra.mxu0 0.0
  %1140 = vmatprep.subr.mxu0 0.0
  %1141 = vmatpush1.msra.mxu0 0.0
  %1142 = vmatprep.subr.mxu0 0.0
  %1143 = vmatpush1.msra.mxu0 0.0
  %1144 = vmatprep.subr.mxu0 0.0
  %1145 = vmatpush1.msra.mxu0 0.0
  %1146 = vmatprep.subr.mxu0 0.0
  %1147 = vmatpush1.msra.mxu0 0.0
  %1148 = vmatprep.subr.mxu0 0.0
  %1149 = vmatpush1.msra.mxu0 0.0
  %1150 = vmatprep.subr.mxu0 0.0
  %1151 = vmatpush1.msra.mxu0 0.0
  %1152 = vmatprep.subr.mxu0 0.0
  %1153 = vmatpush1.msra.mxu0 0.0
  %1154 = vmatprep.subr.mxu0 0.0
  %1155 = vmatpush1.msra.mxu0 0.0
  %1156 = vmatprep.subr.mxu0 0.0
  %1157 = vmatpush1.msra.mxu0 0.0
  %1158 = vmatprep.subr.mxu0 0.0
  %1159 = vmatpush1.msra.mxu0 0.0
  %1160 = vmatprep.subr.mxu0 0.0
  %1161 = vmatpush1.msra.mxu0 0.0
  %1162 = vmatprep.mubr.f32.mxu0 0.0
  %1163 = vmatmul.mubr.f32.gmra.mrb[0].mxu0 %v1096
  %v1164 = vpop.f32.mrb[0].mxu0
  %v1165 = vadd.f32 %v663, %v1164
  %v1166 = vpop.f32.mrb[0].mxu0
  %1167 = vdwg.mxu0
  %1168 = vmax.xlane.f32.xlu0 %v1165
  %v1169 = vpop.xlane.xlu0 %1168
  %v1170 = vsub.f32 %v1165, %v1169
  %v1171 = vmul.f32 %v1170, 1.442695
  %v1172 = vpow.pop %v1171
  %1173 = vadd.xlane.f32.xlu0 %v1172
  %v1174 = vpop.xlane.xlu0 %1173
  %v1175 = vrcp.pop %v1174
  %v1176 = vmul.f32 %v1172, %v1175
  %s1177 = scalar_lea.vmem %s11, 8
  %1178 = vst [vmem:[%s1177] sm:$0xff] %v1176
  %vm1179 = vcmp.ge.f32.partialorder %v1165, %v1169
  %v1180 = vsel %vm1179, %v567, 128
  %v1181 = vand.u32 %v1180, 65535
  %v1182 = vshra.s32 %v1180, 16
  %v1183 = vcvt.s32.f32 %v1181
  %v1184 = vcvt.s32.f32 %v1182
  %1185 = vmin.xlane.f32.xlu0 %v1184
  %v1186 = vpop.xlane.xlu0 %1185
  %vm1187 = vcmp.eq.f32.partialorder %v1184, %v1186
  %v1188 = vsel %vm1187, %v1183, inf
  %1189 = vmin.xlane.f32.xlu0 %v1188
  %v1190 = vpop.xlane.xlu0 %1189
  %v1191 = vcvt.f32.s32 %v1190
  %v1192 = vcvt.f32.s32 %v1186
  %v1193 = vshll.u32 %v1192, 16
  %v1194 = vadd.s32 %v1193, %v1191
  %v1195 = vadd.s32 %v1194, 32
  %vm1196 = vcmp.eq.s32.totalorder %v567, %v1195
  %v1197 = vsel %vm1196, 1, 0
  %v1198 = vcvt.s32.f32 %v1197
  %v1199 = vadd.f32 %v1094, %v1198
  %1200 = vmatprep.subr.mxu0 %v569
  %1201 = vmatpush1.msra.mxu0 %v568
  %1202 = vmatprep.subr.mxu0 %v573
  %1203 = vmatpush1.msra.mxu0 %v572
  %1204 = vmatprep.subr.mxu0 %v577
  %1205 = vmatpush1.msra.mxu0 %v576
  %1206 = vmatprep.subr.mxu0 %v581
  %1207 = vmatpush1.msra.mxu0 %v580
  %1208 = vmatprep.subr.mxu0 %v585
  %1209 = vmatpush1.msra.mxu0 %v584
  %1210 = vmatprep.subr.mxu0 %v589
  %1211 = vmatpush1.msra.mxu0 %v588
  %1212 = vmatprep.subr.mxu0 %v593
  %1213 = vmatpush1.msra.mxu0 %v592
  %1214 = vmatprep.subr.mxu0 %v597
  %1215 = vmatpush1.msra.mxu0 %v596
  %1216 = vmatprep.subr.mxu0 %v601
  %1217 = vmatpush1.msra.mxu0 %v600
  %1218 = vmatprep.subr.mxu0 %v605
  %1219 = vmatpush1.msra.mxu0 %v604
  %1220 = vmatprep.subr.mxu0 %v609
  %1221 = vmatpush1.msra.mxu0 %v608
  %1222 = vmatprep.subr.mxu0 %v613
  %1223 = vmatpush1.msra.mxu0 %v612
  %1224 = vmatprep.subr.mxu0 %v617
  %1225 = vmatpush1.msra.mxu0 %v616
  %1226 = vmatprep.subr.mxu0 %v621
  %1227 = vmatpush1.msra.mxu0 %v620
  %1228 = vmatprep.subr.mxu0 %v625
  %1229 = vmatpush1.msra.mxu0 %v624
  %1230 = vmatprep.subr.mxu0 %v629
  %1231 = vmatpush1.msra.mxu0 %v628
  %1232 = vmatprep.subr.mxu0 0.0
  %1233 = vmatpush1.msra.mxu0 0.0
  %1234 = vmatprep.subr.mxu0 0.0
  %1235 = vmatpush1.msra.mxu0 0.0
  %1236 = vmatprep.subr.mxu0 0.0
  %1237 = vmatpush1.msra.mxu0 0.0
  %1238 = vmatprep.subr.mxu0 0.0
  %1239 = vmatpush1.msra.mxu0 0.0
  %1240 = vmatprep.subr.mxu0 0.0
  %1241 = vmatpush1.msra.mxu0 0.0
  %1242 = vmatprep.subr.mxu0 0.0
  %1243 = vmatpush1.msra.mxu0 0.0
  %1244 = vmatprep.subr.mxu0 0.0
  %1245 = vmatpush1.msra.mxu0 0.0
  %1246 = vmatprep.subr.mxu0 0.0
  %1247 = vmatpush1.msra.mxu0 0.0
  %1248 = vmatprep.subr.mxu0 0.0
  %1249 = vmatpush1.msra.mxu0 0.0
  %1250 = vmatprep.subr.mxu0 0.0
  %1251 = vmatpush1.msra.mxu0 0.0
  %1252 = vmatprep.subr.mxu0 0.0
  %1253 = vmatpush1.msra.mxu0 0.0
  %1254 = vmatprep.subr.mxu0 0.0
  %1255 = vmatpush1.msra.mxu0 0.0
  %1256 = vmatprep.subr.mxu0 0.0
  %1257 = vmatpush1.msra.mxu0 0.0
  %1258 = vmatprep.subr.mxu0 0.0
  %1259 = vmatpush1.msra.mxu0 0.0
  %1260 = vmatprep.subr.mxu0 0.0
  %1261 = vmatpush1.msra.mxu0 0.0
  %1262 = vmatprep.subr.mxu0 0.0
  %1263 = vmatpush1.msra.mxu0 0.0
  %1264 = vmatprep.mubr.f32.mxu0 0.0
  %1265 = vmatmul.mubr.f32.gmra.mrb[0].mxu0 %v1199
  %v1266 = vpop.f32.mrb[0].mxu0
  %v1267 = vadd.f32 %v637, %v1266
  %v1268 = vpop.f32.mrb[0].mxu0
  %v1269 = vadd.f32 %v641, %v1268
  %1270 = vdwg.mxu0
  %1271 = vmatprep.subr.mxu0 %v571
  %1272 = vmatpush1.msra.mxu0 %v570
  %1273 = vmatprep.subr.mxu0 %v575
  %1274 = vmatpush1.msra.mxu0 %v574
  %1275 = vmatprep.subr.mxu0 %v579
  %1276 = vmatpush1.msra.mxu0 %v578
  %1277 = vmatprep.subr.mxu0 %v583
  %1278 = vmatpush1.msra.mxu0 %v582
  %1279 = vmatprep.subr.mxu0 %v587
  %1280 = vmatpush1.msra.mxu0 %v586
  %1281 = vmatprep.subr.mxu0 %v591
  %1282 = vmatpush1.msra.mxu0 %v590
  %1283 = vmatprep.subr.mxu0 %v595
  %1284 = vmatpush1.msra.mxu0 %v594
  %1285 = vmatprep.subr.mxu0 %v599
  %1286 = vmatpush1.msra.mxu0 %v598
  %1287 = vmatprep.subr.mxu0 %v603
  %1288 = vmatpush1.msra.mxu0 %v602
  %1289 = vmatprep.subr.mxu0 %v607
  %1290 = vmatpush1.msra.mxu0 %v606
  %1291 = vmatprep.subr.mxu0 %v611
  %1292 = vmatpush1.msra.mxu0 %v610
  %1293 = vmatprep.subr.mxu0 %v615
  %1294 = vmatpush1.msra.mxu0 %v614
  %1295 = vmatprep.subr.mxu0 %v619
  %1296 = vmatpush1.msra.mxu0 %v618
  %1297 = vmatprep.subr.mxu0 %v623
  %1298 = vmatpush1.msra.mxu0 %v622
  %1299 = vmatprep.subr.mxu0 %v627
  %1300 = vmatpush1.msra.mxu0 %v626
  %1301 = vmatprep.subr.mxu0 %v631
  %1302 = vmatpush1.msra.mxu0 %v630
  %1303 = vmatprep.subr.mxu0 0.0
  %1304 = vmatpush1.msra.mxu0 0.0
  %1305 = vmatprep.subr.mxu0 0.0
  %1306 = vmatpush1.msra.mxu0 0.0
  %1307 = vmatprep.subr.mxu0 0.0
  %1308 = vmatpush1.msra.mxu0 0.0
  %1309 = vmatprep.subr.mxu0 0.0
  %1310 = vmatpush1.msra.mxu0 0.0
  %1311 = vmatprep.subr.mxu0 0.0
  %1312 = vmatpush1.msra.mxu0 0.0
  %1313 = vmatprep.subr.mxu0 0.0
  %1314 = vmatpush1.msra.mxu0 0.0
  %1315 = vmatprep.subr.mxu0 0.0
  %1316 = vmatpush1.msra.mxu0 0.0
  %1317 = vmatprep.subr.mxu0 0.0
  %1318 = vmatpush1.msra.mxu0 0.0
  %1319 = vmatprep.subr.mxu0 0.0
  %1320 = vmatpush1.msra.mxu0 0.0
  %1321 = vmatprep.subr.mxu0 0.0
  %1322 = vmatpush1.msra.mxu0 0.0
  %1323 = vmatprep.subr.mxu0 0.0
  %1324 = vmatpush1.msra.mxu0 0.0
  %1325 = vmatprep.subr.mxu0 0.0
  %1326 = vmatpush1.msra.mxu0 0.0
  %1327 = vmatprep.subr.mxu0 0.0
  %1328 = vmatpush1.msra.mxu0 0.0
  %1329 = vmatprep.subr.mxu0 0.0
  %1330 = vmatpush1.msra.mxu0 0.0
  %1331 = vmatprep.subr.mxu0 0.0
  %1332 = vmatpush1.msra.mxu0 0.0
  %1333 = vmatprep.subr.mxu0 0.0
  %1334 = vmatpush1.msra.mxu0 0.0
  %1335 = vmatprep.mubr.f32.mxu0 0.0
  %1336 = vmatmul.mubr.f32.gmra.mrb[0].mxu0 %v1199
  %v1337 = vpop.f32.mrb[0].mxu0
  %v1338 = vadd.f32 %v645, %v1337
  %v1339 = vpop.f32.mrb[0].mxu0
  %v1340 = vadd.f32 %v649, %v1339
  %1341 = vdwg.mxu0
  %v1342 = vxor.u32 %v1267, 2147483648
  %v1343 = vmul.f32 %v1342, 1.442695
  %v1344 = vpow.pop %v1343
  %v1345 = vadd.f32 %v1344, 1.0
  %v1346 = vrcp.pop %v1345
  %v1347 = vmul.f32 1.0, %v1346
  %v1348 = vxor.u32 %v1269, 2147483648
  %v1349 = vmul.f32 %v1348, 1.442695
  %v1350 = vpow.pop %v1349
  %v1351 = vadd.f32 %v1350, 1.0
  %v1352 = vrcp.pop %v1351
  %v1353 = vmul.f32 1.0, %v1352
  %v1354 = vmul.f32 %v1347, %v1340
  %v1355 = vadd.f32 %v1338, %v1354
  %v1356 = vtanh.pop %v1355
  %v1357 = vsub.f32 1.0, %v1353
  %v1358 = vmul.f32 %v1357, %v1356
  %v1359 = vmul.f32 %v1353, %v1094
  %v1360 = vadd.f32 %v1358, %v1359
  %v1362 = vsel %vm52, %v1360, 0
  %1364 = vmatprep.subr.mxu0 0.0
  %1365 = vmatpush1.msra.mxu0 %v654
  %1366 = vmatprep.subr.mxu0 0.0
  %1367 = vmatpush1.msra.mxu0 %v655
  %1368 = vmatprep.subr.mxu0 0.0
  %1369 = vmatpush1.msra.mxu0 %v656
  %1370 = vmatprep.subr.mxu0 0.0
  %1371 = vmatpush1.msra.mxu0 %v657
  %1372 = vmatprep.subr.mxu0 0.0
  %1373 = vmatpush1.msra.mxu0 0.0
  %1374 = vmatprep.subr.mxu0 0.0
  %1375 = vmatpush1.msra.mxu0 0.0
  %1376 = vmatprep.subr.mxu0 0.0
  %1377 = vmatpush1.msra.mxu0 0.0
  %1378 = vmatprep.subr.mxu0 0.0
  %1379 = vmatpush1.msra.mxu0 0.0
  %1380 = vmatprep.subr.mxu0 0.0
  %1381 = vmatpush1.msra.mxu0 0.0
  %1382 = vmatprep.subr.mxu0 0.0
  %1383 = vmatpush1.msra.mxu0 0.0
  %1384 = vmatprep.subr.mxu0 0.0
  %1385 = vmatpush1.msra.mxu0 0.0
  %1386 = vmatprep.subr.mxu0 0.0
  %1387 = vmatpush1.msra.mxu0 0.0
  %1388 = vmatprep.subr.mxu0 0.0
  %1389 = vmatpush1.msra.mxu0 0.0
  %1390 = vmatprep.subr.mxu0 0.0
  %1391 = vmatpush1.msra.mxu0 0.0
  %1392 = vmatprep.subr.mxu0 0.0
  %1393 = vmatpush1.msra.mxu0 0.0
  %1394 = vmatprep.subr.mxu0 0.0
  %1395 = vmatpush1.msra.mxu0 0.0
  %1396 = vmatprep.subr.mxu0 0.0
  %1397 = vmatpush1.msra.mxu0 0.0
  %1398 = vmatprep.subr.mxu0 0.0
  %1399 = vmatpush1.msra.mxu0 0.0
  %1400 = vmatprep.subr.mxu0 0.0
  %1401 = vmatpush1.msra.mxu0 0.0
  %1402 = vmatprep.subr.mxu0 0.0
  %1403 = vmatpush1.msra.mxu0 0.0
  %1404 = vmatprep.subr.mxu0 0.0
  %1405 = vmatpush1.msra.mxu0 0.0
  %1406 = vmatprep.subr.mxu0 0.0
  %1407 = vmatpush1.msra.mxu0 0.0
  %1408 = vmatprep.subr.mxu0 0.0
  %1409 = vmatpush1.msra.mxu0 0.0
  %1410 = vmatprep.subr.mxu0 0.0
  %1411 = vmatpush1.msra.mxu0 0.0
  %1412 = vmatprep.subr.mxu0 0.0
  %1413 = vmatpush1.msra.mxu0 0.0
  %1414 = vmatprep.subr.mxu0 0.0
  %1415 = vmatpush1.msra.mxu0 0.0
  %1416 = vmatprep.subr.mxu0 0.0
  %1417 = vmatpush1.msra.mxu0 0.0
  %1418 = vmatprep.subr.mxu0 0.0
  %1419 = vmatpush1.msra.mxu0 0.0
  %1420 = vmatprep.subr.mxu0 0.0
  %1421 = vmatpush1.msra.mxu0 0.0
  %1422 = vmatprep.subr.mxu0 0.0
  %1423 = vmatpush1.msra.mxu0 0.0
  %1424 = vmatprep.subr.mxu0 0.0
  %1425 = vmatpush1.msra.mxu0 0.0
  %1426 = vmatprep.subr.mxu0 0.0
  %1427 = vmatpush1.msra.mxu0 0.0
  %1428 = vmatprep.mubr.f32.mxu0 0.0
  %1429 = vmatmul.mubr.f32.gmra.mrb[0].mxu0 %v1362
  %v1430 = vpop.f32.mrb[0].mxu0
  %v1431 = vadd.f32 %v663, %v1430
  %v1432 = vpop.f32.mrb[0].mxu0
  %1433 = vdwg.mxu0
  %1434 = vmax.xlane.f32.xlu0 %v1431
  %v1435 = vpop.xlane.xlu0 %1434
  %v1436 = vsub.f32 %v1431, %v1435
  %v1437 = vmul.f32 %v1436, 1.442695
  %v1438 = vpow.pop %v1437
  %1439 = vadd.xlane.f32.xlu0 %v1438
  %v1440 = vpop.xlane.xlu0 %1439
  %v1441 = vrcp.pop %v1440
  %v1442 = vmul.f32 %v1438, %v1441
  %s1443 = scalar_lea.vmem %s11, 16
  %1444 = vst [vmem:[%s1443] sm:$0xff] %v1442
  %s1445 = scalar_lea.vmem %s10, 16
  %v1446 = vld [vmem:[%s1445] sm:$0xff]
  %v1447 = vadd.f32 %v1360, %v1446
  %1448 = vmatprep.subr.mxu0 %v569
  %1449 = vmatpush1.msra.mxu0 %v568
  %1450 = vmatprep.subr.mxu0 %v573
  %1451 = vmatpush1.msra.mxu0 %v572
  %1452 = vmatprep.subr.mxu0 %v577
  %1453 = vmatpush1.msra.mxu0 %v576
  %1454 = vmatprep.subr.mxu0 %v581
  %1455 = vmatpush1.msra.mxu0 %v580
  %1456 = vmatprep.subr.mxu0 %v585
  %1457 = vmatpush1.msra.mxu0 %v584
  %1458 = vmatprep.subr.mxu0 %v589
  %1459 = vmatpush1.msra.mxu0 %v588
  %1460 = vmatprep.subr.mxu0 %v593
  %1461 = vmatpush1.msra.mxu0 %v592
  %1462 = vmatprep.subr.mxu0 %v597
  %1463 = vmatpush1.msra.mxu0 %v596
  %1464 = vmatprep.subr.mxu0 %v601
  %1465 = vmatpush1.msra.mxu0 %v600
  %1466 = vmatprep.subr.mxu0 %v605
  %1467 = vmatpush1.msra.mxu0 %v604
  %1468 = vmatprep.subr.mxu0 %v609
  %1469 = vmatpush1.msra.mxu0 %v608
  %1470 = vmatprep.subr.mxu0 %v613
  %1471 = vmatpush1.msra.mxu0 %v612
  %1472 = vmatprep.subr.mxu0 %v617
  %1473 = vmatpush1.msra.mxu0 %v616
  %1474 = vmatprep.subr.mxu0 %v621
  %1475 = vmatpush1.msra.mxu0 %v620
  %1476 = vmatprep.subr.mxu0 %v625
  %1477 = vmatpush1.msra.mxu0 %v624
  %1478 = vmatprep.subr.mxu0 %v629
  %1479 = vmatpush1.msra.mxu0 %v628
  %1480 = vmatprep.subr.mxu0 0.0
  %1481 = vmatpush1.msra.mxu0 0.0
  %1482 = vmatprep.subr.mxu0 0.0
  %1483 = vmatpush1.msra.mxu0 0.0
  %1484 = vmatprep.subr.mxu0 0.0
  %1485 = vmatpush1.msra.mxu0 0.0
  %1486 = vmatprep.subr.mxu0 0.0
  %1487 = vmatpush1.msra.mxu0 0.0
  %1488 = vmatprep.subr.mxu0 0.0
  %1489 = vmatpush1.msra.mxu0 0.0
  %1490 = vmatprep.subr.mxu0 0.0
  %1491 = vmatpush1.msra.mxu0 0.0
  %1492 = vmatprep.subr.mxu0 0.0
  %1493 = vmatpush1.msra.mxu0 0.0
  %1494 = vmatprep.subr.mxu0 0.0
  %1495 = vmatpush1.msra.mxu0 0.0
  %1496 = vmatprep.subr.mxu0 0.0
  %1497 = vmatpush1.msra.mxu0 0.0
  %1498 = vmatprep.subr.mxu0 0.0
  %1499 = vmatpush1.msra.mxu0 0.0
  %1500 = vmatprep.subr.mxu0 0.0
  %1501 = vmatpush1.msra.mxu0 0.0
  %1502 = vmatprep.subr.mxu0 0.0
  %1503 = vmatpush1.msra.mxu0 0.0
  %1504 = vmatprep.subr.mxu0 0.0
  %1505 = vmatpush1.msra.mxu0 0.0
  %1506 = vmatprep.subr.mxu0 0.0
  %1507 = vmatpush1.msra.mxu0 0.0
  %1508 = vmatprep.subr.mxu0 0.0
  %1509 = vmatpush1.msra.mxu0 0.0
  %1510 = vmatprep.subr.mxu0 0.0
  %1511 = vmatpush1.msra.mxu0 0.0
  %1512 = vmatprep.mubr.f32.mxu0 0.0
  %1513 = vmatmul.mubr.f32.gmra.mrb[0].mxu0 %v1447
  %v1514 = vpop.f32.mrb[0].mxu0
  %v1515 = vadd.f32 %v637, %v1514
  %v1516 = vpop.f32.mrb[0].mxu0
  %v1517 = vadd.f32 %v641, %v1516
  %1518 = vdwg.mxu0
  %1519 = vmatprep.subr.mxu0 %v571
  %1520 = vmatpush1.msra.mxu0 %v570
  %1521 = vmatprep.subr.mxu0 %v575
  %1522 = vmatpush1.msra.mxu0 %v574
  %1523 = vmatprep.subr.mxu0 %v579
  %1524 = vmatpush1.msra.mxu0 %v578
  %1525 = vmatprep.subr.mxu0 %v583
  %1526 = vmatpush1.msra.mxu0 %v582
  %1527 = vmatprep.subr.mxu0 %v587
  %1528 = vmatpush1.msra.mxu0 %v586
  %1529 = vmatprep.subr.mxu0 %v591
  %1530 = vmatpush1.msra.mxu0 %v590
  %1531 = vmatprep.subr.mxu0 %v595
  %1532 = vmatpush1.msra.mxu0 %v594
  %1533 = vmatprep.subr.mxu0 %v599
  %1534 = vmatpush1.msra.mxu0 %v598
  %1535 = vmatprep.subr.mxu0 %v603
  %1536 = vmatpush1.msra.mxu0 %v602
  %1537 = vmatprep.subr.mxu0 %v607
  %1538 = vmatpush1.msra.mxu0 %v606
  %1539 = vmatprep.subr.mxu0 %v611
  %1540 = vmatpush1.msra.mxu0 %v610
  %1541 = vmatprep.subr.mxu0 %v615
  %1542 = vmatpush1.msra.mxu0 %v614
  %1543 = vmatprep.subr.mxu0 %v619
  %1544 = vmatpush1.msra.mxu0 %v618
  %1545 = vmatprep.subr.mxu0 %v623
  %1546 = vmatpush1.msra.mxu0 %v622
  %1547 = vmatprep.subr.mxu0 %v627
  %1548 = vmatpush1.msra.mxu0 %v626
  %1549 = vmatprep.subr.mxu0 %v631
  %1550 = vmatpush1.msra.mxu0 %v630
  %1551 = vmatprep.subr.mxu0 0.0
  %1552 = vmatpush1.msra.mxu0 0.0
  %1553 = vmatprep.subr.mxu0 0.0
  %1554 = vmatpush1.msra.mxu0 0.0
  %1555 = vmatprep.subr.mxu0 0.0
  %1556 = vmatpush1.msra.mxu0 0.0
  %1557 = vmatprep.subr.mxu0 0.0
  %1558 = vmatpush1.msra.mxu0 0.0
  %1559 = vmatprep.subr.mxu0 0.0
  %1560 = vmatpush1.msra.mxu0 0.0
  %1561 = vmatprep.subr.mxu0 0.0
  %1562 = vmatpush1.msra.mxu0 0.0
  %1563 = vmatprep.subr.mxu0 0.0
  %1564 = vmatpush1.msra.mxu0 0.0
  %1565 = vmatprep.subr.mxu0 0.0
  %1566 = vmatpush1.msra.mxu0 0.0
  %1567 = vmatprep.subr.mxu0 0.0
  %1568 = vmatpush1.msra.mxu0 0.0
  %1569 = vmatprep.subr.mxu0 0.0
  %1570 = vmatpush1.msra.mxu0 0.0
  %1571 = vmatprep.subr.mxu0 0.0
  %1572 = vmatpush1.msra.mxu0 0.0
  %1573 = vmatprep.subr.mxu0 0.0
  %1574 = vmatpush1.msra.mxu0 0.0
  %1575 = vmatprep.subr.mxu0 0.0
  %1576 = vmatpush1.msra.mxu0 0.0
  %1577 = vmatprep.subr.mxu0 0.0
  %1578 = vmatpush1.msra.mxu0 0.0
  %1579 = vmatprep.subr.mxu0 0.0
  %1580 = vmatpush1.msra.mxu0 0.0
  %1581 = vmatprep.subr.mxu0 0.0
  %1582 = vmatpush1.msra.mxu0 0.0
  %1583 = vmatprep.mubr.f32.mxu0 0.0
  %1584 = vmatmul.mubr.f32.gmra.mrb[0].mxu0 %v1447
  %v1585 = vpop.f32.mrb[0].mxu0
  %v1586 = vadd.f32 %v645, %v1585
  %v1587 = vpop.f32.mrb[0].mxu0
  %v1588 = vadd.f32 %v649, %v1587
  %1589 = vdwg.mxu0
  %v1590 = vxor.u32 %v1515, 2147483648
  %v1591 = vmul.f32 %v1590, 1.442695
  %v1592 = vpow.pop %v1591
  %v1593 = vadd.f32 %v1592, 1.0
  %v1594 = vrcp.pop %v1593
  %v1595 = vmul.f32 1.0, %v1594
  %v1596 = vxor.u32 %v1517, 2147483648
  %v1597 = vmul.f32 %v1596, 1.442695
  %v1598 = vpow.pop %v1597
  %v1599 = vadd.f32 %v1598, 1.0
  %v1600 = vrcp.pop %v1599
  %v1601 = vmul.f32 1.0, %v1600
  %v1602 = vmul.f32 %v1595, %v1588
  %v1603 = vadd.f32 %v1586, %v1602
  %v1604 = vtanh.pop %v1603
  %v1605 = vsub.f32 1.0, %v1601
  %v1606 = vmul.f32 %v1605, %v1604
  %v1607 = vmul.f32 %v1601, %v1360
  %v1608 = vadd.f32 %v1606, %v1607
  %v1610 = vsel %vm52, %v1608, 0
  %1612 = vmatprep.subr.mxu0 0.0
  %1613 = vmatpush1.msra.mxu0 %v654
  %1614 = vmatprep.subr.mxu0 0.0
  %1615 = vmatpush1.msra.mxu0 %v655
  %1616 = vmatprep.subr.mxu0 0.0
  %1617 = vmatpush1.msra.mxu0 %v656
  %1618 = vmatprep.subr.mxu0 0.0
  %1619 = vmatpush1.msra.mxu0 %v657
  %1620 = vmatprep.subr.mxu0 0.0
  %1621 = vmatpush1.msra.mxu0 0.0
  %1622 = vmatprep.subr.mxu0 0.0
  %1623 = vmatpush1.msra.mxu0 0.0
  %1624 = vmatprep.subr.mxu0 0.0
  %1625 = vmatpush1.msra.mxu0 0.0
  %1626 = vmatprep.subr.mxu0 0.0
  %1627 = vmatpush1.msra.mxu0 0.0
  %1628 = vmatprep.subr.mxu0 0.0
  %1629 = vmatpush1.msra.mxu0 0.0
  %1630 = vmatprep.subr.mxu0 0.0
  %1631 = vmatpush1.msra.mxu0 0.0
  %1632 = vmatprep.subr.mxu0 0.0
  %1633 = vmatpush1.msra.mxu0 0.0
  %1634 = vmatprep.subr.mxu0 0.0
  %1635 = vmatpush1.msra.mxu0 0.0
  %1636 = vmatprep.subr.mxu0 0.0
  %1637 = vmatpush1.msra.mxu0 0.0
  %1638 = vmatprep.subr.mxu0 0.0
  %1639 = vmatpush1.msra.mxu0 0.0
  %1640 = vmatprep.subr.mxu0 0.0
  %1641 = vmatpush1.msra.mxu0 0.0
  %1642 = vmatprep.subr.mxu0 0.0
  %1643 = vmatpush1.msra.mxu0 0.0
  %1644 = vmatprep.subr.mxu0 0.0
  %1645 = vmatpush1.msra.mxu0 0.0
  %1646 = vmatprep.subr.mxu0 0.0
  %1647 = vmatpush1.msra.mxu0 0.0
  %1648 = vmatprep.subr.mxu0 0.0
  %1649 = vmatpush1.msra.mxu0 0.0
  %1650 = vmatprep.subr.mxu0 0.0
  %1651 = vmatpush1.msra.mxu0 0.0
  %1652 = vmatprep.subr.mxu0 0.0
  %1653 = vmatpush1.msra.mxu0 0.0
  %1654 = vmatprep.subr.mxu0 0.0
  %1655 = vmatpush1.msra.mxu0 0.0
  %1656 = vmatprep.subr.mxu0 0.0
  %1657 = vmatpush1.msra.mxu0 0.0
  %1658 = vmatprep.subr.mxu0 0.0
  %1659 = vmatpush1.msra.mxu0 0.0
  %1660 = vmatprep.subr.mxu0 0.0
  %1661 = vmatpush1.msra.mxu0 0.0
  %1662 = vmatprep.subr.mxu0 0.0
  %1663 = vmatpush1.msra.mxu0 0.0
  %1664 = vmatprep.subr.mxu0 0.0
  %1665 = vmatpush1.msra.mxu0 0.0
  %1666 = vmatprep.subr.mxu0 0.0
  %1667 = vmatpush1.msra.mxu0 0.0
  %1668 = vmatprep.subr.mxu0 0.0
  %1669 = vmatpush1.msra.mxu0 0.0
  %1670 = vmatprep.subr.mxu0 0.0
  %1671 = vmatpush1.msra.mxu0 0.0
  %1672 = vmatprep.subr.mxu0 0.0
  %1673 = vmatpush1.msra.mxu0 0.0
  %1674 = vmatprep.subr.mxu0 0.0
  %1675 = vmatpush1.msra.mxu0 0.0
  %1676 = vmatprep.mubr.f32.mxu0 0.0
  %1677 = vmatmul.mubr.f32.gmra.mrb[0].mxu0 %v1610
  %v1678 = vpop.f32.mrb[0].mxu0
  %v1679 = vadd.f32 %v663, %v1678
  %v1680 = vpop.f32.mrb[0].mxu0
  %1681 = vdwg.mxu0
  %1682 = vmax.xlane.f32.xlu0 %v1679
  %v1683 = vpop.xlane.xlu0 %1682
  %v1684 = vsub.f32 %v1679, %v1683
  %v1685 = vmul.f32 %v1684, 1.442695
  %v1686 = vpow.pop %v1685
  %1687 = vadd.xlane.f32.xlu0 %v1686
  %v1688 = vpop.xlane.xlu0 %1687
  %v1689 = vrcp.pop %v1688
  %v1690 = vmul.f32 %v1686, %v1689
  %s1691 = scalar_lea.vmem %s11, 24
  %1692 = vst [vmem:[%s1691] sm:$0xff] %v1690
  %s1693 = scalar_lea.vmem %s10, 24
  %v1694 = vld [vmem:[%s1693] sm:$0xff]
  %v1695 = vadd.f32 %v1608, %v1694
  %1696 = vmatprep.subr.mxu0 %v569
  %1697 = vmatpush1.msra.mxu0 %v568
  %1698 = vmatprep.subr.mxu0 %v573
  %1699 = vmatpush1.msra.mxu0 %v572
  %1700 = vmatprep.subr.mxu0 %v577
  %1701 = vmatpush1.msra.mxu0 %v576
  %1702 = vmatprep.subr.mxu0 %v581
  %1703 = vmatpush1.msra.mxu0 %v580
  %1704 = vmatprep.subr.mxu0 %v585
  %1705 = vmatpush1.msra.mxu0 %v584
  %1706 = vmatprep.subr.mxu0 %v589
  %1707 = vmatpush1.msra.mxu0 %v588
  %1708 = vmatprep.subr.mxu0 %v593
  %1709 = vmatpush1.msra.mxu0 %v592
  %1710 = vmatprep.subr.mxu0 %v597
  %1711 = vmatpush1.msra.mxu0 %v596
  %1712 = vmatprep.subr.mxu0 %v601
  %1713 = vmatpush1.msra.mxu0 %v600
  %1714 = vmatprep.subr.mxu0 %v605
  %1715 = vmatpush1.msra.mxu0 %v604
  %1716 = vmatprep.subr.mxu0 %v609
  %1717 = vmatpush1.msra.mxu0 %v608
  %1718 = vmatprep.subr.mxu0 %v613
  %1719 = vmatpush1.msra.mxu0 %v612
  %1720 = vmatprep.subr.mxu0 %v617
  %1721 = vmatpush1.msra.mxu0 %v616
  %1722 = vmatprep.subr.mxu0 %v621
  %1723 = vmatpush1.msra.mxu0 %v620
  %1724 = vmatprep.subr.mxu0 %v625
  %1725 = vmatpush1.msra.mxu0 %v624
  %1726 = vmatprep.subr.mxu0 %v629
  %1727 = vmatpush1.msra.mxu0 %v628
  %1728 = vmatprep.subr.mxu0 0.0
  %1729 = vmatpush1.msra.mxu0 0.0
  %1730 = vmatprep.subr.mxu0 0.0
  %1731 = vmatpush1.msra.mxu0 0.0
  %1732 = vmatprep.subr.mxu0 0.0
  %1733 = vmatpush1.msra.mxu0 0.0
  %1734 = vmatprep.subr.mxu0 0.0
  %1735 = vmatpush1.msra.mxu0 0.0
  %1736 = vmatprep.subr.mxu0 0.0
  %1737 = vmatpush1.msra.mxu0 0.0
  %1738 = vmatprep.subr.mxu0 0.0
  %1739 = vmatpush1.msra.mxu0 0.0
  %1740 = vmatprep.subr.mxu0 0.0
  %1741 = vmatpush1.msra.mxu0 0.0
  %1742 = vmatprep.subr.mxu0 0.0
  %1743 = vmatpush1.msra.mxu0 0.0
  %1744 = vmatprep.subr.mxu0 0.0
  %1745 = vmatpush1.msra.mxu0 0.0
  %1746 = vmatprep.subr.mxu0 0.0
  %1747 = vmatpush1.msra.mxu0 0.0
  %1748 = vmatprep.subr.mxu0 0.0
  %1749 = vmatpush1.msra.mxu0 0.0
  %1750 = vmatprep.subr.mxu0 0.0
  %1751 = vmatpush1.msra.mxu0 0.0
  %1752 = vmatprep.subr.mxu0 0.0
  %1753 = vmatpush1.msra.mxu0 0.0
  %1754 = vmatprep.subr.mxu0 0.0
  %1755 = vmatpush1.msra.mxu0 0.0
  %1756 = vmatprep.subr.mxu0 0.0
  %1757 = vmatpush1.msra.mxu0 0.0
  %1758 = vmatprep.subr.mxu0 0.0
  %1759 = vmatpush1.msra.mxu0 0.0
  %1760 = vmatprep.mubr.f32.mxu0 0.0
  %1761 = vmatmul.mubr.f32.gmra.mrb[0].mxu0 %v1695
  %v1762 = vpop.f32.mrb[0].mxu0
  %v1763 = vadd.f32 %v637, %v1762
  %v1764 = vpop.f32.mrb[0].mxu0
  %v1765 = vadd.f32 %v641, %v1764
  %1766 = vdwg.mxu0
  %1767 = vmatprep.subr.mxu0 %v571
  %1768 = vmatpush1.msra.mxu0 %v570
  %1769 = vmatprep.subr.mxu0 %v575
  %1770 = vmatpush1.msra.mxu0 %v574
  %1771 = vmatprep.subr.mxu0 %v579
  %1772 = vmatpush1.msra.mxu0 %v578
  %1773 = vmatprep.subr.mxu0 %v583
  %1774 = vmatpush1.msra.mxu0 %v582
  %1775 = vmatprep.subr.mxu0 %v587
  %1776 = vmatpush1.msra.mxu0 %v586
  %1777 = vmatprep.subr.mxu0 %v591
  %1778 = vmatpush1.msra.mxu0 %v590
  %1779 = vmatprep.subr.mxu0 %v595
  %1780 = vmatpush1.msra.mxu0 %v594
  %1781 = vmatprep.subr.mxu0 %v599
  %1782 = vmatpush1.msra.mxu0 %v598
  %1783 = vmatprep.subr.mxu0 %v603
  %1784 = vmatpush1.msra.mxu0 %v602
  %1785 = vmatprep.subr.mxu0 %v607
  %1786 = vmatpush1.msra.mxu0 %v606
  %1787 = vmatprep.subr.mxu0 %v611
  %1788 = vmatpush1.msra.mxu0 %v610
  %1789 = vmatprep.subr.mxu0 %v615
  %1790 = vmatpush1.msra.mxu0 %v614
  %1791 = vmatprep.subr.mxu0 %v619
  %1792 = vmatpush1.msra.mxu0 %v618
  %1793 = vmatprep.subr.mxu0 %v623
  %1794 = vmatpush1.msra.mxu0 %v622
  %1795 = vmatprep.subr.mxu0 %v627
  %1796 = vmatpush1.msra.mxu0 %v626
  %1797 = vmatprep.subr.mxu0 %v631
  %1798 = vmatpush1.msra.mxu0 %v630
  %1799 = vmatprep.subr.mxu0 0.0
  %1800 = vmatpush1.msra.mxu0 0.0
  %1801 = vmatprep.subr.mxu0 0.0
  %1802 = vmatpush1.msra.mxu0 0.0
  %1803 = vmatprep.subr.mxu0 0.0
  %1804 = vmatpush1.msra.mxu0 0.0
  %1805 = vmatprep.subr.mxu0 0.0
  %1806 = vmatpush1.msra.mxu0 0.0
  %1807 = vmatprep.subr.mxu0 0.0
  %1808 = vmatpush1.msra.mxu0 0.0
  %1809 = vmatprep.subr.mxu0 0.0
  %1810 = vmatpush1.msra.mxu0 0.0
  %1811 = vmatprep.subr.mxu0 0.0
  %1812 = vmatpush1.msra.mxu0 0.0
  %1813 = vmatprep.subr.mxu0 0.0
  %1814 = vmatpush1.msra.mxu0 0.0
  %1815 = vmatprep.subr.mxu0 0.0
  %1816 = vmatpush1.msra.mxu0 0.0
  %1817 = vmatprep.subr.mxu0 0.0
  %1818 = vmatpush1.msra.mxu0 0.0
  %1819 = vmatprep.subr.mxu0 0.0
  %1820 = vmatpush1.msra.mxu0 0.0
  %1821 = vmatprep.subr.mxu0 0.0
  %1822 = vmatpush1.msra.mxu0 0.0
  %1823 = vmatprep.subr.mxu0 0.0
  %1824 = vmatpush1.msra.mxu0 0.0
  %1825 = vmatprep.subr.mxu0 0.0
  %1826 = vmatpush1.msra.mxu0 0.0
  %1827 = vmatprep.subr.mxu0 0.0
  %1828 = vmatpush1.msra.mxu0 0.0
  %1829 = vmatprep.subr.mxu0 0.0
  %1830 = vmatpush1.msra.mxu0 0.0
  %1831 = vmatprep.mubr.f32.mxu0 0.0
  %1832 = vmatmul.mubr.f32.gmra.mrb[0].mxu0 %v1695
  %v1833 = vpop.f32.mrb[0].mxu0
  %v1834 = vadd.f32 %v645, %v1833
  %v1835 = vpop.f32.mrb[0].mxu0
  %v1836 = vadd.f32 %v649, %v1835
  %1837 = vdwg.mxu0
  %v1838 = vxor.u32 %v1763, 2147483648
  %v1839 = vmul.f32 %v1838, 1.442695
  %v1840 = vpow.pop %v1839
  %v1841 = vadd.f32 %v1840, 1.0
  %v1842 = vrcp.pop %v1841
  %v1843 = vmul.f32 1.0, %v1842
  %v1844 = vxor.u32 %v1765, 2147483648
  %v1845 = vmul.f32 %v1844, 1.442695
  %v1846 = vpow.pop %v1845
  %v1847 = vadd.f32 %v1846, 1.0
  %v1848 = vrcp.pop %v1847
  %v1849 = vmul.f32 1.0, %v1848
  %v1850 = vmul.f32 %v1843, %v1836
  %v1851 = vadd.f32 %v1834, %v1850
  %v1852 = vtanh.pop %v1851
  %v1853 = vsub.f32 1.0, %v1849
  %v1854 = vmul.f32 %v1853, %v1852
  %v1855 = vmul.f32 %v1849, %v1608
  %v1856 = vadd.f32 %v1854, %v1855
  %v1858 = vsel %vm52, %v1856, 0
  %1860 = vmatprep.subr.mxu0 0.0
  %1861 = vmatpush1.msra.mxu0 %v654
  %1862 = vmatprep.subr.mxu0 0.0
  %1863 = vmatpush1.msra.mxu0 %v655
  %1864 = vmatprep.subr.mxu0 0.0
  %1865 = vmatpush1.msra.mxu0 %v656
  %1866 = vmatprep.subr.mxu0 0.0
  %1867 = vmatpush1.msra.mxu0 %v657
  %1868 = vmatprep.subr.mxu0 0.0
  %1869 = vmatpush1.msra.mxu0 0.0
  %1870 = vmatprep.subr.mxu0 0.0
  %1871 = vmatpush1.msra.mxu0 0.0
  %1872 = vmatprep.subr.mxu0 0.0
  %1873 = vmatpush1.msra.mxu0 0.0
  %1874 = vmatprep.subr.mxu0 0.0
  %1875 = vmatpush1.msra.mxu0 0.0
  %1876 = vmatprep.subr.mxu0 0.0
  %1877 = vmatpush1.msra.mxu0 0.0
  %1878 = vmatprep.subr.mxu0 0.0
  %1879 = vmatpush1.msra.mxu0 0.0
  %1880 = vmatprep.subr.mxu0 0.0
  %1881 = vmatpush1.msra.mxu0 0.0
  %1882 = vmatprep.subr.mxu0 0.0
  %1883 = vmatpush1.msra.mxu0 0.0
  %1884 = vmatprep.subr.mxu0 0.0
  %1885 = vmatpush1.msra.mxu0 0.0
  %1886 = vmatprep.subr.mxu0 0.0
  %1887 = vmatpush1.msra.mxu0 0.0
  %1888 = vmatprep.subr.mxu0 0.0
  %1889 = vmatpush1.msra.mxu0 0.0
  %1890 = vmatprep.subr.mxu0 0.0
  %1891 = vmatpush1.msra.mxu0 0.0
  %1892 = vmatprep.subr.mxu0 0.0
  %1893 = vmatpush1.msra.mxu0 0.0
  %1894 = vmatprep.subr.mxu0 0.0
  %1895 = vmatpush1.msra.mxu0 0.0
  %1896 = vmatprep.subr.mxu0 0.0
  %1897 = vmatpush1.msra.mxu0 0.0
  %1898 = vmatprep.subr.mxu0 0.0
  %1899 = vmatpush1.msra.mxu0 0.0
  %1900 = vmatprep.subr.mxu0 0.0
  %1901 = vmatpush1.msra.mxu0 0.0
  %1902 = vmatprep.subr.mxu0 0.0
  %1903 = vmatpush1.msra.mxu0 0.0
  %1904 = vmatprep.subr.mxu0 0.0
  %1905 = vmatpush1.msra.mxu0 0.0
  %1906 = vmatprep.subr.mxu0 0.0
  %1907 = vmatpush1.msra.mxu0 0.0
  %1908 = vmatprep.subr.mxu0 0.0
  %1909 = vmatpush1.msra.mxu0 0.0
  %1910 = vmatprep.subr.mxu0 0.0
  %1911 = vmatpush1.msra.mxu0 0.0
  %1912 = vmatprep.subr.mxu0 0.0
  %1913 = vmatpush1.msra.mxu0 0.0
  %1914 = vmatprep.subr.mxu0 0.0
  %1915 = vmatpush1.msra.mxu0 0.0
  %1916 = vmatprep.subr.mxu0 0.0
  %1917 = vmatpush1.msra.mxu0 0.0
  %1918 = vmatprep.subr.mxu0 0.0
  %1919 = vmatpush1.msra.mxu0 0.0
  %1920 = vmatprep.subr.mxu0 0.0
  %1921 = vmatpush1.msra.mxu0 0.0
  %1922 = vmatprep.subr.mxu0 0.0
  %1923 = vmatpush1.msra.mxu0 0.0
  %1924 = vmatprep.mubr.f32.mxu0 0.0
  %1925 = vmatmul.mubr.f32.gmra.mrb[0].mxu0 %v1858
  %v1926 = vpop.f32.mrb[0].mxu0
  %v1927 = vadd.f32 %v663, %v1926
  %v1928 = vpop.f32.mrb[0].mxu0
  %1929 = vdwg.mxu0
  %1930 = vmax.xlane.f32.xlu0 %v1927
  %v1931 = vpop.xlane.xlu0 %1930
  %v1932 = vsub.f32 %v1927, %v1931
  %v1933 = vmul.f32 %v1932, 1.442695
  %v1934 = vpow.pop %v1933
  %1935 = vadd.xlane.f32.xlu0 %v1934
  %v1936 = vpop.xlane.xlu0 %1935
  %v1937 = vrcp.pop %v1936
  %v1938 = vmul.f32 %v1934, %v1937
  %s1939 = scalar_lea.vmem %s11, 32
  %1940 = vst [vmem:[%s1939] sm:$0xff] %v1938
  %vm1941 = vcmp.ge.f32.partialorder %v1927, %v1931
  %v1942 = vsel %vm1941, %v567, 128
  %v1943 = vand.u32 %v1942, 65535
  %v1944 = vshra.s32 %v1942, 16
  %v1945 = vcvt.s32.f32 %v1943
  %v1946 = vcvt.s32.f32 %v1944
  %1947 = vmin.xlane.f32.xlu0 %v1946
  %v1948 = vpop.xlane.xlu0 %1947
  %vm1949 = vcmp.eq.f32.partialorder %v1946, %v1948
  %v1950 = vsel %vm1949, %v1945, inf
  %1951 = vmin.xlane.f32.xlu0 %v1950
  %v1952 = vpop.xlane.xlu0 %1951
  %v1953 = vcvt.f32.s32 %v1952
  %v1954 = vcvt.f32.s32 %v1948
  %v1955 = vshll.u32 %v1954, 16
  %v1956 = vadd.s32 %v1955, %v1953
  %v1957 = vadd.s32 %v1956, 32
  %vm1958 = vcmp.eq.s32.totalorder %v567, %v1957
  %v1959 = vsel %vm1958, 1, 0
  %v1960 = vcvt.s32.f32 %v1959
  %v1961 = vadd.f32 %v1856, %v1960
  %1962 = vmatprep.subr.mxu0 %v569
  %1963 = vmatpush1.msra.mxu0 %v568
  %1964 = vmatprep.subr.mxu0 %v573
  %1965 = vmatpush1.msra.mxu0 %v572
  %1966 = vmatprep.subr.mxu0 %v577
  %1967 = vmatpush1.msra.mxu0 %v576
  %1968 = vmatprep.subr.mxu0 %v581
  %1969 = vmatpush1.msra.mxu0 %v580
  %1970 = vmatprep.subr.mxu0 %v585
  %1971 = vmatpush1.msra.mxu0 %v584
  %1972 = vmatprep.subr.mxu0 %v589
  %1973 = vmatpush1.msra.mxu0 %v588
  %1974 = vmatprep.subr.mxu0 %v593
  %1975 = vmatpush1.msra.mxu0 %v592
  %1976 = vmatprep.subr.mxu0 %v597
  %1977 = vmatpush1.msra.mxu0 %v596
  %1978 = vmatprep.subr.mxu0 %v601
  %1979 = vmatpush1.msra.mxu0 %v600
  %1980 = vmatprep.subr.mxu0 %v605
  %1981 = vmatpush1.msra.mxu0 %v604
  %1982 = vmatprep.subr.mxu0 %v609
  %1983 = vmatpush1.msra.mxu0 %v608
  %1984 = vmatprep.subr.mxu0 %v613
  %1985 = vmatpush1.msra.mxu0 %v612
  %1986 = vmatprep.subr.mxu0 %v617
  %1987 = vmatpush1.msra.mxu0 %v616
  %1988 = vmatprep.subr.mxu0 %v621
  %1989 = vmatpush1.msra.mxu0 %v620
  %1990 = vmatprep.subr.mxu0 %v625
  %1991 = vmatpush1.msra.mxu0 %v624
  %1992 = vmatprep.subr.mxu0 %v629
  %1993 = vmatpush1.msra.mxu0 %v628
  %1994 = vmatprep.subr.mxu0 0.0
  %1995 = vmatpush1.msra.mxu0 0.0
  %1996 = vmatprep.subr.mxu0 0.0
  %1997 = vmatpush1.msra.mxu0 0.0
  %1998 = vmatprep.subr.mxu0 0.0
  %1999 = vmatpush1.msra.mxu0 0.0
  %2000 = vmatprep.subr.mxu0 0.0
  %2001 = vmatpush1.msra.mxu0 0.0
  %2002 = vmatprep.subr.mxu0 0.0
  %2003 = vmatpush1.msra.mxu0 0.0
  %2004 = vmatprep.subr.mxu0 0.0
  %2005 = vmatpush1.msra.mxu0 0.0
  %2006 = vmatprep.subr.mxu0 0.0
  %2007 = vmatpush1.msra.mxu0 0.0
  %2008 = vmatprep.subr.mxu0 0.0
  %2009 = vmatpush1.msra.mxu0 0.0
  %2010 = vmatprep.subr.mxu0 0.0
  %2011 = vmatpush1.msra.mxu0 0.0
  %2012 = vmatprep.subr.mxu0 0.0
  %2013 = vmatpush1.msra.mxu0 0.0
  %2014 = vmatprep.subr.mxu0 0.0
  %2015 = vmatpush1.msra.mxu0 0.0
  %2016 = vmatprep.subr.mxu0 0.0
  %2017 = vmatpush1.msra.mxu0 0.0
  %2018 = vmatprep.subr.mxu0 0.0
  %2019 = vmatpush1.msra.mxu0 0.0
  %2020 = vmatprep.subr.mxu0 0.0
  %2021 = vmatpush1.msra.mxu0 0.0
  %2022 = vmatprep.subr.mxu0 0.0
  %2023 = vmatpush1.msra.mxu0 0.0
  %2024 = vmatprep.subr.mxu0 0.0
  %2025 = vmatpush1.msra.mxu0 0.0
  %2026 = vmatprep.mubr.f32.mxu0 0.0
  %2027 = vmatmul.mubr.f32.gmra.mrb[0].mxu0 %v1961
  %v2028 = vpop.f32.mrb[0].mxu0
  %v2029 = vadd.f32 %v637, %v2028
  %v2030 = vpop.f32.mrb[0].mxu0
  %v2031 = vadd.f32 %v641, %v2030
  %2032 = vdwg.mxu0
  %2033 = vmatprep.subr.mxu0 %v571
  %2034 = vmatpush1.msra.mxu0 %v570
  %2035 = vmatprep.subr.mxu0 %v575
  %2036 = vmatpush1.msra.mxu0 %v574
  %2037 = vmatprep.subr.mxu0 %v579
  %2038 = vmatpush1.msra.mxu0 %v578
  %2039 = vmatprep.subr.mxu0 %v583
  %2040 = vmatpush1.msra.mxu0 %v582
  %2041 = vmatprep.subr.mxu0 %v587
  %2042 = vmatpush1.msra.mxu0 %v586
  %2043 = vmatprep.subr.mxu0 %v591
  %2044 = vmatpush1.msra.mxu0 %v590
  %2045 = vmatprep.subr.mxu0 %v595
  %2046 = vmatpush1.msra.mxu0 %v594
  %2047 = vmatprep.subr.mxu0 %v599
  %2048 = vmatpush1.msra.mxu0 %v598
  %2049 = vmatprep.subr.mxu0 %v603
  %2050 = vmatpush1.msra.mxu0 %v602
  %2051 = vmatprep.subr.mxu0 %v607
  %2052 = vmatpush1.msra.mxu0 %v606
  %2053 = vmatprep.subr.mxu0 %v611
  %2054 = vmatpush1.msra.mxu0 %v610
  %2055 = vmatprep.subr.mxu0 %v615
  %2056 = vmatpush1.msra.mxu0 %v614
  %2057 = vmatprep.subr.mxu0 %v619
  %2058 = vmatpush1.msra.mxu0 %v618
  %2059 = vmatprep.subr.mxu0 %v623
  %2060 = vmatpush1.msra.mxu0 %v622
  %2061 = vmatprep.subr.mxu0 %v627
  %2062 = vmatpush1.msra.mxu0 %v626
  %2063 = vmatprep.subr.mxu0 %v631
  %2064 = vmatpush1.msra.mxu0 %v630
  %2065 = vmatprep.subr.mxu0 0.0
  %2066 = vmatpush1.msra.mxu0 0.0
  %2067 = vmatprep.subr.mxu0 0.0
  %2068 = vmatpush1.msra.mxu0 0.0
  %2069 = vmatprep.subr.mxu0 0.0
  %2070 = vmatpush1.msra.mxu0 0.0
  %2071 = vmatprep.subr.mxu0 0.0
  %2072 = vmatpush1.msra.mxu0 0.0
  %2073 = vmatprep.subr.mxu0 0.0
  %2074 = vmatpush1.msra.mxu0 0.0
  %2075 = vmatprep.subr.mxu0 0.0
  %2076 = vmatpush1.msra.mxu0 0.0
  %2077 = vmatprep.subr.mxu0 0.0
  %2078 = vmatpush1.msra.mxu0 0.0
  %2079 = vmatprep.subr.mxu0 0.0
  %2080 = vmatpush1.msra.mxu0 0.0
  %2081 = vmatprep.subr.mxu0 0.0
  %2082 = vmatpush1.msra.mxu0 0.0
  %2083 = vmatprep.subr.mxu0 0.0
  %2084 = vmatpush1.msra.mxu0 0.0
  %2085 = vmatprep.subr.mxu0 0.0
  %2086 = vmatpush1.msra.mxu0 0.0
  %2087 = vmatprep.subr.mxu0 0.0
  %2088 = vmatpush1.msra.mxu0 0.0
  %2089 = vmatprep.subr.mxu0 0.0
  %2090 = vmatpush1.msra.mxu0 0.0
  %2091 = vmatprep.subr.mxu0 0.0
  %2092 = vmatpush1.msra.mxu0 0.0
  %2093 = vmatprep.subr.mxu0 0.0
  %2094 = vmatpush1.msra.mxu0 0.0
  %2095 = vmatprep.subr.mxu0 0.0
  %2096 = vmatpush1.msra.mxu0 0.0
  %2097 = vmatprep.mubr.f32.mxu0 0.0
  %2098 = vmatmul.mubr.f32.gmra.mrb[0].mxu0 %v1961
  %v2099 = vpop.f32.mrb[0].mxu0
  %v2100 = vadd.f32 %v645, %v2099
  %v2101 = vpop.f32.mrb[0].mxu0
  %v2102 = vadd.f32 %v649, %v2101
  %2103 = vdwg.mxu0
  %v2104 = vxor.u32 %v2029, 2147483648
  %v2105 = vmul.f32 %v2104, 1.442695
  %v2106 = vpow.pop %v2105
  %v2107 = vadd.f32 %v2106, 1.0
  %v2108 = vrcp.pop %v2107
  %v2109 = vmul.f32 1.0, %v2108
  %v2110 = vxor.u32 %v2031, 2147483648
  %v2111 = vmul.f32 %v2110, 1.442695
  %v2112 = vpow.pop %v2111
  %v2113 = vadd.f32 %v2112, 1.0
  %v2114 = vrcp.pop %v2113
  %v2115 = vmul.f32 1.0, %v2114
  %v2116 = vmul.f32 %v2109, %v2102
  %v2117 = vadd.f32 %v2100, %v2116
  %v2118 = vtanh.pop %v2117
  %v2119 = vsub.f32 1.0, %v2115
  %v2120 = vmul.f32 %v2119, %v2118
  %v2121 = vmul.f32 %v2115, %v1856
  %v2122 = vadd.f32 %v2120, %v2121
  %v2124 = vsel %vm52, %v2122, 0
  %2126 = vmatprep.subr.mxu0 0.0
  %2127 = vmatpush1.msra.mxu0 %v654
  %2128 = vmatprep.subr.mxu0 0.0
  %2129 = vmatpush1.msra.mxu0 %v655
  %2130 = vmatprep.subr.mxu0 0.0
  %2131 = vmatpush1.msra.mxu0 %v656
  %2132 = vmatprep.subr.mxu0 0.0
  %2133 = vmatpush1.msra.mxu0 %v657
  %2134 = vmatprep.subr.mxu0 0.0
  %2135 = vmatpush1.msra.mxu0 0.0
  %2136 = vmatprep.subr.mxu0 0.0
  %2137 = vmatpush1.msra.mxu0 0.0
  %2138 = vmatprep.subr.mxu0 0.0
  %2139 = vmatpush1.msra.mxu0 0.0
  %2140 = vmatprep.subr.mxu0 0.0
  %2141 = vmatpush1.msra.mxu0 0.0
  %2142 = vmatprep.subr.mxu0 0.0
  %2143 = vmatpush1.msra.mxu0 0.0
  %2144 = vmatprep.subr.mxu0 0.0
  %2145 = vmatpush1.msra.mxu0 0.0
  %2146 = vmatprep.subr.mxu0 0.0
  %2147 = vmatpush1.msra.mxu0 0.0
  %2148 = vmatprep.subr.mxu0 0.0
  %2149 = vmatpush1.msra.mxu0 0.0
  %2150 = vmatprep.subr.mxu0 0.0
  %2151 = vmatpush1.msra.mxu0 0.0
  %2152 = vmatprep.subr.mxu0 0.0
  %2153 = vmatpush1.msra.mxu0 0.0
  %2154 = vmatprep.subr.mxu0 0.0
  %2155 = vmatpush1.msra.mxu0 0.0
  %2156 = vmatprep.subr.mxu0 0.0
  %2157 = vmatpush1.msra.mxu0 0.0
  %2158 = vmatprep.subr.mxu0 0.0
  %2159 = vmatpush1.msra.mxu0 0.0
  %2160 = vmatprep.subr.mxu0 0.0
  %2161 = vmatpush1.msra.mxu0 0.0
  %2162 = vmatprep.subr.mxu0 0.0
  %2163 = vmatpush1.msra.mxu0 0.0
  %2164 = vmatprep.subr.mxu0 0.0
  %2165 = vmatpush1.msra.mxu0 0.0
  %2166 = vmatprep.subr.mxu0 0.0
  %2167 = vmatpush1.msra.mxu0 0.0
  %2168 = vmatprep.subr.mxu0 0.0
  %2169 = vmatpush1.msra.mxu0 0.0
  %2170 = vmatprep.subr.mxu0 0.0
  %2171 = vmatpush1.msra.mxu0 0.0
  %2172 = vmatprep.subr.mxu0 0.0
  %2173 = vmatpush1.msra.mxu0 0.0
  %2174 = vmatprep.subr.mxu0 0.0
  %2175 = vmatpush1.msra.mxu0 0.0
  %2176 = vmatprep.subr.mxu0 0.0
  %2177 = vmatpush1.msra.mxu0 0.0
  %2178 = vmatprep.subr.mxu0 0.0
  %2179 = vmatpush1.msra.mxu0 0.0
  %2180 = vmatprep.subr.mxu0 0.0
  %2181 = vmatpush1.msra.mxu0 0.0
  %2182 = vmatprep.subr.mxu0 0.0
  %2183 = vmatpush1.msra.mxu0 0.0
  %2184 = vmatprep.subr.mxu0 0.0
  %2185 = vmatpush1.msra.mxu0 0.0
  %2186 = vmatprep.subr.mxu0 0.0
  %2187 = vmatpush1.msra.mxu0 0.0
  %2188 = vmatprep.subr.mxu0 0.0
  %2189 = vmatpush1.msra.mxu0 0.0
  %2190 = vmatprep.mubr.f32.mxu0 0.0
  %2191 = vmatmul.mubr.f32.gmra.mrb[0].mxu0 %v2124
  %v2192 = vpop.f32.mrb[0].mxu0
  %v2193 = vadd.f32 %v663, %v2192
  %v2194 = vpop.f32.mrb[0].mxu0
  %2195 = vdwg.mxu0
  %2196 = vmax.xlane.f32.xlu0 %v2193
  %v2197 = vpop.xlane.xlu0 %2196
  %v2198 = vsub.f32 %v2193, %v2197
  %v2199 = vmul.f32 %v2198, 1.442695
  %v2200 = vpow.pop %v2199
  %2201 = vadd.xlane.f32.xlu0 %v2200
  %v2202 = vpop.xlane.xlu0 %2201
  %v2203 = vrcp.pop %v2202
  %v2204 = vmul.f32 %v2200, %v2203
  %s2205 = scalar_lea.vmem %s11, 40
  %2206 = vst [vmem:[%s2205] sm:$0xff] %v2204
  // Predicated region
  $region46: #{kgcvae_forward.1} parent=0 // pred_check
    _
  $region47: #{kgcvae_forward.1} parent=0 // pred_check_branch
    %2208 = sbr.rel (0) target = $region49
  $region48: #{kgcvae_forward.1} parent=0 // pred_region
    _
  $region49: #{kgcvae_forward.1} parent=0 // pred_fallthru
    _
  // Predicated region
  $region50: #{kgcvae_forward.1} parent=0 // pred_check
    _
  $region51: #{kgcvae_forward.1} parent=0 // pred_check_branch
    %2210 = sbr.rel (0) target = $region53
  $region52: #{kgcvae_forward.1} parent=0 // pred_region
    _
  $region53: #{kgcvae_forward.1} parent=0 // pred_fallthru
    _
  // Predicated region
  $region54: #{kgcvae_forward.1} parent=0 // pred_check
    _
  $region55: #{kgcvae_forward.1} parent=0 // pred_check_branch
    %2212 = sbr.rel (0) target = $region57
  $region56: #{kgcvae_forward.1} parent=0 // pred_region
    _
  $region57: #{kgcvae_forward.1} parent=0 // pred_fallthru
    _
  // Predicated region
  $region58: #{kgcvae_forward.1} parent=0 // pred_check
    _
  $region59: #{kgcvae_forward.1} parent=0 // pred_check_branch
    %2214 = sbr.rel (0) target = $region61
  $region60: #{kgcvae_forward.1} parent=0 // pred_region
    _
  $region61: #{kgcvae_forward.1} parent=0 // pred_fallthru
    _

</llo_original>
